<compile_context>
chip_gen: v7x
topology: tpu7x:2x2x1
jax: 0.10.0
libtpu: 0.0.40
codegen_flags: <defaults>
</compile_context>

<pallas_src>
import functools
import math

import jax
import jax.numpy as jnp
from jax import lax
from jax.experimental import pallas as pl
from jax.experimental.pallas import tpu as pltpu

# Model hyper-parameters (small, consistent with the module's __init__).
D_MODEL = 32
N_HEADS = 4
FF_DIM = 64
HEAD_DIM = D_MODEL // N_HEADS
LN_EPS = 1e-5


def _layernorm(x, gamma, beta):
    mu = jnp.mean(x, axis=-1, keepdims=True)
    xc = x - mu
    var = jnp.mean(xc * xc, axis=-1, keepdims=True)
    return xc * lax.rsqrt(var + LN_EPS) * gamma + beta


def _encoder_kernel(x_ref, mask_ref, wqkv_ref, bqkv_ref, wo_ref,
                    w1_ref, bf1_ref, w2_ref, dvec_ref,
                    y_ref, score_ref,
                    *, tb, seq, d_model, n_heads, head_dim, mxu_dtype):
    """One grid step == one block of `tb` batch elements."""
    tokens = tb * seq

    def mm(a, w):
        # weights are already stored in mxu_dtype; accumulate in f32
        return jnp.dot(a.astype(mxu_dtype), w,
                       preferred_element_type=jnp.float32)

    x = x_ref[...].astype(jnp.float32)              # (tb, S, D)
    xf = x.reshape(tokens, d_model)                 # flatten tokens for matmuls

    # Packed D-wide parameter vectors (one small slab instead of 6 operands).
    bo = dvec_ref[0:1, :]
    g1 = dvec_ref[1:2, :]
    be1 = dvec_ref[2:3, :]
    g2 = dvec_ref[3:4, :]
    be2 = dvec_ref[4:5, :]
    bf2 = dvec_ref[5:6, :]

    # --- fused QKV projection over all tb*S tokens (one MXU push, N=3D) ---
    qkv = mm(xf, wqkv_ref[...]) + bqkv_ref[...]     # (tokens, 3D)
    qkv = qkv.reshape(tb, seq, 3 * d_model)

    madd = mask_ref[...]                            # (tb, S, S) additive mask
    scale = 1.0 / math.sqrt(head_dim)

    head_outs = []
    for h in range(n_heads):        # static unroll; each head batched over tb
        lo = h * head_dim
        qh = qkv[:, :, lo:lo + head_dim]
        kh = qkv[:, :, d_model + lo:d_model + lo + head_dim]
        vh = qkv[:, :, 2 * d_model + lo:2 * d_model + lo + head_dim]
        s = jnp.einsum('bqd,bkd->bqk',
                       qh.astype(mxu_dtype), kh.astype(mxu_dtype),
                       preferred_element_type=jnp.float32) * scale + madd
        # numerically-stable softmax
        s = s - jnp.max(s, axis=-1, keepdims=True)
        p = jnp.exp(s)
        p = p * pl.reciprocal(jnp.sum(p, axis=-1, keepdims=True), approx=True)
        score_ref[:, h, :, :] = p.astype(score_ref.dtype)
        head_outs.append(jnp.einsum('bqk,bkd->bqd',
                                    p.astype(mxu_dtype), vh.astype(mxu_dtype),
                                    preferred_element_type=jnp.float32))

    attn = jnp.concatenate(head_outs, axis=-1).reshape(tokens, d_model)
    attn = mm(attn, wo_ref[...]) + bo

    # TODO(synk): dropout omitted (inference / eval mode -> identity).
    h1 = _layernorm(xf + attn, g1, be1)

    # --- feed-forward over all tokens ---
    f = mm(h1, w1_ref[...]) + bf1_ref[...]
    f = jnp.maximum(f, 0.0)
    f = mm(f, w2_ref[...]) + bf2

    h2 = _layernorm(h1 + f, g2, be2)
    y_ref[...] = h2.reshape(tb, seq, d_model).astype(y_ref.dtype)


def _pick_block_batch(batch, seq, target_tokens=256):
    """Smallest divisor of `batch` giving >= target_tokens tokens per step
    (fills the MXU M dim); fall back to the whole batch if none reaches it."""
    for d in range(1, batch + 1):
        if batch % d == 0 and d * seq >= target_tokens:
            return d
    return batch


def encoder_layer(x, src_mask, params, *, mxu_dtype=jnp.float32):
    # mxu_dtype=jnp.bfloat16 doubles MXU throughput on v6e/v7x (f32 accumulate
    # and f32 elementwise math are kept either way).
    B, S, D = x.shape
    assert D == D_MODEL
    TB = _pick_block_batch(B, S)
    grid = (B // TB,)

    # --- parameter packing (7 operands instead of 16) ---
    wqkv = jnp.concatenate([params["wq"], params["wk"], params["wv"]],
                           axis=1).astype(mxu_dtype)                  # (D, 3D)
    bqkv = jnp.concatenate([params["bq"], params["bk"], params["bv"]],
                           axis=1).astype(jnp.float32)                # (1, 3D)
    wo = params["wo"].astype(mxu_dtype)                               # (D, D)
    w1 = params["w1"].astype(mxu_dtype)                               # (D, FF)
    bf1 = params["bf1"].astype(jnp.float32)                           # (1, FF)
    w2 = params["w2"].astype(mxu_dtype)                               # (FF, D)
    dvec = jnp.concatenate([params["bo"], params["g1"], params["be1"],
                            params["g2"], params["be2"], params["bf2"]],
                           axis=0).astype(jnp.float32)                # (6, D)

    # additive mask, precomputed once: 0 where attend, -1e9 where masked
    mask_add = jnp.where(src_mask[:, 0] == 0, -1e9, 0.0).astype(jnp.float32)

    weights = [wqkv, bqkv, wo, w1, bf1, w2, dvec]

    def full_spec(a):
        # whole (small) array resident in VMEM, same block for every grid step
        return pl.BlockSpec(a.shape, lambda b, n=a.ndim: (0,) * n)

    in_specs = (
        [pl.BlockSpec((TB, S, D), lambda b: (b, 0, 0)),        # x block
         pl.BlockSpec((TB, S, S), lambda b: (b, 0, 0))]        # mask block
        + [full_spec(w) for w in weights]
    )
    out_specs = (
        pl.BlockSpec((TB, S, D), lambda b: (b, 0, 0)),
        pl.BlockSpec((TB, N_HEADS, S, S), lambda b: (b, 0, 0, 0)),
    )
    out_shape = (
        jax.ShapeDtypeStruct((B, S, D), jnp.float32),
        jax.ShapeDtypeStruct((B, N_HEADS, S, S), jnp.float32),
    )
    kernel = functools.partial(
        _encoder_kernel, tb=TB, seq=S, d_model=D, n_heads=N_HEADS,
        head_dim=HEAD_DIM, mxu_dtype=mxu_dtype)

    return pl.pallas_call(
        kernel,
        grid=grid,
        in_specs=in_specs,
        out_specs=out_specs,
        out_shape=out_shape,
        compiler_params=pltpu.CompilerParams(
            dimension_semantics=("parallel",),
            vmem_limit_bytes=32 * 1024 * 1024),
    )(x, mask_add, *weights)


def encoder_layer_ref(x, mask, P):
    """Pure-JAX reference (matches PyTorch Encoder_Layer in eval mode)."""
    hp = lax.Precision.HIGHEST
    dot = functools.partial(jnp.matmul, precision=hp)
    B, S, D = x.shape

    q = dot(x, P["wq"]) + P["bq"]
    k = dot(x, P["wk"]) + P["bk"]
    v = dot(x, P["wv"]) + P["bv"]

    def split(t):
        return t.reshape(B, S, N_HEADS, HEAD_DIM).transpose(0, 2, 1, 3)

    qh, kh, vh = split(q), split(k), split(v)
    s = jnp.einsum("bhqd,bhkd->bhqk", qh, kh, precision=hp) / (HEAD_DIM ** 0.5)
    s = jnp.where(mask == 0, -1e9, s)
    p = jax.nn.softmax(s, axis=-1)
    o = jnp.einsum("bhqk,bhkd->bhqd", p, vh, precision=hp)
    o = o.transpose(0, 2, 1, 3).reshape(B, S, D)
    o = dot(o, P["wo"]) + P["bo"]

    def ln(t, g, be):
        mu = t.mean(-1, keepdims=True)
        var = ((t - mu) ** 2).mean(-1, keepdims=True)
        return (t - mu) / jnp.sqrt(var + LN_EPS) * g + be

    h1 = ln(x + o, P["g1"], P["be1"])
    f = jnp.maximum(dot(h1, P["w1"]) + P["bf1"], 0.0)
    f = dot(f, P["w2"]) + P["bf2"]
    h2 = ln(h1 + f, P["g2"], P["be2"])
    return h2, p


def init_params(key):
    ks = jax.random.split(key, 12)

    def lin(k, fan_in, fan_out):
        k1, k2 = jax.random.split(k)
        w = jax.random.normal(k1, (fan_in, fan_out), jnp.float32) * 0.05
        b = jax.random.normal(k2, (1, fan_out), jnp.float32) * 0.05
        return w, b

    P = {}
    P["wq"], P["bq"] = lin(ks[0], D_MODEL, D_MODEL)
    P["wk"], P["bk"] = lin(ks[1], D_MODEL, D_MODEL)
    P["wv"], P["bv"] = lin(ks[2], D_MODEL, D_MODEL)
    P["wo"], P["bo"] = lin(ks[3], D_MODEL, D_MODEL)
    P["w1"], P["bf1"] = lin(ks[4], D_MODEL, FF_DIM)
    P["w2"], P["bf2"] = lin(ks[5], FF_DIM, D_MODEL)
    P["g1"] = 1.0 + 0.05 * jax.random.normal(ks[6], (1, D_MODEL), jnp.float32)
    P["be1"] = 0.05 * jax.random.normal(ks[7], (1, D_MODEL), jnp.float32)
    P["g2"] = 1.0 + 0.05 * jax.random.normal(ks[8], (1, D_MODEL), jnp.float32)
    P["be2"] = 0.05 * jax.random.normal(ks[9], (1, D_MODEL), jnp.float32)
    return P


if __name__ == "__main__":
    B, S = 2, 8
    key = jax.random.PRNGKey(0)
    k_x, k_p = jax.random.split(key)

    x = jax.random.normal(k_x, (B, S, D_MODEL), jnp.float32)
    # src_mask: 1 = attend, 0 = masked. Mask out last 2 key positions of batch 1.
    src_mask = jnp.ones((B, 1, S, S), jnp.int32)
    src_mask = src_mask.at[1, :, :, S - 2:].set(0)

    params = init_params(k_p)

    y, score = encoder_layer(x, src_mask, params)
    y = jax.block_until_ready(y)
    score = jax.block_until_ready(score)

    y_ref, score_ref = encoder_layer_ref(x, src_mask, params)
    assert y.shape == (B, S, D_MODEL) and score.shape == (B, N_HEADS, S, S)
    assert jnp.allclose(y, y_ref, atol=5e-2, rtol=5e-2), "output mismatch"
    assert jnp.allclose(score, score_ref, atol=5e-2, rtol=5e-2), "score mismatch"

    print("KERNEL_OK")
</pallas_src>

<mosaic_0001>
module attributes {stable_mosaic.version = 11 : i64} {
  func.func @_encoder_kernel(%arg0: i32, %arg1: memref<2x8x32xf32, #tpu.memory_space<vmem>>, %arg2: memref<2x8x8xf32, #tpu.memory_space<vmem>>, %arg3: memref<32x96xf32, #tpu.memory_space<vmem>>, %arg4: memref<1x96xf32, #tpu.memory_space<vmem>>, %arg5: memref<32x32xf32, #tpu.memory_space<vmem>>, %arg6: memref<32x64xf32, #tpu.memory_space<vmem>>, %arg7: memref<1x64xf32, #tpu.memory_space<vmem>>, %arg8: memref<64x32xf32, #tpu.memory_space<vmem>>, %arg9: memref<6x32xf32, #tpu.memory_space<vmem>>, %arg10: memref<2x8x32xf32, #tpu.memory_space<vmem>>, %arg11: memref<2x4x8x8xf32, #tpu.memory_space<vmem>>) attributes {dimension_semantics = [#tpu.dimension_semantics<parallel>], iteration_bounds = array<i64: 1>, scalar_prefetch = 0 : i64, scratch_operands = 0 : i64, tpu.core_type = #tpu.core_type<tc>, window_params = [{transform_indices = @transform_0, window_bounds = array<i64: 2, 8, 32>}, {transform_indices = @transform_1, window_bounds = array<i64: 2, 8, 8>}, {pipeline_mode = #tpu.pipeline_mode<synchronous>, transform_indices = @transform_2, window_bounds = array<i64: 32, 96>}, {pipeline_mode = #tpu.pipeline_mode<synchronous>, transform_indices = @transform_3, window_bounds = array<i64: 1, 96>}, {pipeline_mode = #tpu.pipeline_mode<synchronous>, transform_indices = @transform_4, window_bounds = array<i64: 32, 32>}, {pipeline_mode = #tpu.pipeline_mode<synchronous>, transform_indices = @transform_5, window_bounds = array<i64: 32, 64>}, {pipeline_mode = #tpu.pipeline_mode<synchronous>, transform_indices = @transform_6, window_bounds = array<i64: 1, 64>}, {pipeline_mode = #tpu.pipeline_mode<synchronous>, transform_indices = @transform_7, window_bounds = array<i64: 64, 32>}, {pipeline_mode = #tpu.pipeline_mode<synchronous>, transform_indices = @transform_8, window_bounds = array<i64: 6, 32>}, {transform_indices = @transform_9, window_bounds = array<i64: 2, 8, 32>}, {transform_indices = @transform_10, window_bounds = array<i64: 2, 4, 8, 8>}]} {
    %c0 = arith.constant 0 : index
    %c0_0 = arith.constant 0 : index
    %c0_1 = arith.constant 0 : index
    %0 = vector.load %arg1[%c0, %c0_0, %c0_1] : memref<2x8x32xf32, #tpu.memory_space<vmem>>, vector<2x8x32xf32>
    %1 = vector.shape_cast %0 : vector<2x8x32xf32> to vector<16x32xf32>
    %c0_2 = arith.constant 0 : index
    %c0_3 = arith.constant 0 : index
    %2 = vector.load %arg9[%c0_2, %c0_3] : memref<6x32xf32, #tpu.memory_space<vmem>>, vector<1x32xf32>
    %c1 = arith.constant 1 : index
    %c0_4 = arith.constant 0 : index
    %3 = vector.load %arg9[%c1, %c0_4] : memref<6x32xf32, #tpu.memory_space<vmem>>, vector<1x32xf32>
    %c2 = arith.constant 2 : index
    %c0_5 = arith.constant 0 : index
    %4 = vector.load %arg9[%c2, %c0_5] : memref<6x32xf32, #tpu.memory_space<vmem>>, vector<1x32xf32>
    %c3 = arith.constant 3 : index
    %c0_6 = arith.constant 0 : index
    %5 = vector.load %arg9[%c3, %c0_6] : memref<6x32xf32, #tpu.memory_space<vmem>>, vector<1x32xf32>
    %c4 = arith.constant 4 : index
    %c0_7 = arith.constant 0 : index
    %6 = vector.load %arg9[%c4, %c0_7] : memref<6x32xf32, #tpu.memory_space<vmem>>, vector<1x32xf32>
    %c5 = arith.constant 5 : index
    %c0_8 = arith.constant 0 : index
    %7 = vector.load %arg9[%c5, %c0_8] : memref<6x32xf32, #tpu.memory_space<vmem>>, vector<1x32xf32>
    %c0_9 = arith.constant 0 : index
    %c0_10 = arith.constant 0 : index
    %8 = vector.load %arg3[%c0_9, %c0_10] : memref<32x96xf32, #tpu.memory_space<vmem>>, vector<32x96xf32>
    %cst = arith.constant dense<0.000000e+00> : vector<16x96xf32>
    %9 = tpu.matmul %1, %8, %cst {dimension_numbers = #tpu.dot_dimension_numbers<[1], [0], [0], [1], [0, 0, 1, 1], [], []>} : vector<16x32xf32>, vector<32x96xf32>, vector<16x96xf32> -> vector<16x96xf32>
    %c0_11 = arith.constant 0 : index
    %c0_12 = arith.constant 0 : index
    %10 = vector.load %arg4[%c0_11, %c0_12] : memref<1x96xf32, #tpu.memory_space<vmem>>, vector<1x96xf32>
    %11 = vector.broadcast %10 : vector<1x96xf32> to vector<16x96xf32>
    %12 = arith.addf %9, %11 : vector<16x96xf32>
    %13 = vector.shape_cast %12 : vector<16x96xf32> to vector<2x8x96xf32>
    %c0_13 = arith.constant 0 : index
    %c0_14 = arith.constant 0 : index
    %c0_15 = arith.constant 0 : index
    %14 = vector.load %arg2[%c0_13, %c0_14, %c0_15] : memref<2x8x8xf32, #tpu.memory_space<vmem>>, vector<2x8x8xf32>
    %15 = vector.extract_strided_slice %13 {offsets = [0, 0, 0], sizes = [2, 8, 8], strides = [1, 1, 1]} : vector<2x8x96xf32> to vector<2x8x8xf32>
    %16 = vector.extract_strided_slice %13 {offsets = [0, 0, 32], sizes = [2, 8, 8], strides = [1, 1, 1]} : vector<2x8x96xf32> to vector<2x8x8xf32>
    %17 = vector.extract_strided_slice %13 {offsets = [0, 0, 64], sizes = [2, 8, 8], strides = [1, 1, 1]} : vector<2x8x96xf32> to vector<2x8x8xf32>
    "tpu.trace_start"() <{level = 10 : i32, message = "bqd,bkd->bqk"}> : () -> ()
    %cst_16 = arith.constant dense<0.000000e+00> : vector<2x8x8xf32>
    %18 = tpu.matmul %15, %16, %cst_16 {dimension_numbers = #tpu.dot_dimension_numbers<[2], [2], [1], [1], [0, 0, 0, 1, 1, 1], [0], [0]>} : vector<2x8x8xf32>, vector<2x8x8xf32>, vector<2x8x8xf32> -> vector<2x8x8xf32>
    "tpu.trace_stop"() : () -> ()
    %cst_17 = arith.constant 0.353553385 : f32
    %19 = vector.broadcast %cst_17 : f32 to vector<2x8x8xf32>
    %20 = arith.mulf %18, %19 : vector<2x8x8xf32>
    %21 = arith.addf %20, %14 : vector<2x8x8xf32>
    %cst_18 = arith.constant dense<0xFF800000> : vector<2x8xf32>
    %22 = vector.multi_reduction <maximumf>, %21, %cst_18 [2] : vector<2x8x8xf32> to vector<2x8xf32>
    %23 = vector.shape_cast %22 : vector<2x8xf32> to vector<2x8x1xf32>
    %24 = vector.broadcast %23 : vector<2x8x1xf32> to vector<2x8x8xf32>
    %25 = arith.subf %21, %24 : vector<2x8x8xf32>
    %26 = math.exp %25 : vector<2x8x8xf32>
    %cst_19 = arith.constant dense<0.000000e+00> : vector<2x8xf32>
    %27 = vector.multi_reduction <add>, %26, %cst_19 [2] : vector<2x8x8xf32> to vector<2x8xf32>
    %28 = vector.shape_cast %27 : vector<2x8xf32> to vector<2x8x1xf32>
    %29 = tpu.reciprocal %28 {approx = true} : vector<2x8x1xf32> -> vector<2x8x1xf32>
    %30 = vector.broadcast %29 : vector<2x8x1xf32> to vector<2x8x8xf32>
    %31 = arith.mulf %26, %30 : vector<2x8x8xf32>
    %c0_20 = arith.constant 0 : index
    %c0_21 = arith.constant 0 : index
    %c0_22 = arith.constant 0 : index
    %c0_23 = arith.constant 0 : index
    %32 = vector.load %arg11[%c0_20, %c0_21, %c0_22, %c0_23] : memref<2x4x8x8xf32, #tpu.memory_space<vmem>>, vector<2x1x8x8xf32>
    %33 = vector.shape_cast %32 : vector<2x1x8x8xf32> to vector<2x8x8xf32>
    %34 = vector.shape_cast %31 : vector<2x8x8xf32> to vector<2x1x8x8xf32>
    tpu.vector_store %arg11[%c0_20, %c0_21, %c0_22, %c0_23], %34 {strides = array<i32>} : memref<2x4x8x8xf32, #tpu.memory_space<vmem>>, vector<2x1x8x8xf32>,
    "tpu.trace_start"() <{level = 10 : i32, message = "bqk,bkd->bqd"}> : () -> ()
    %cst_24 = arith.constant dense<0.000000e+00> : vector<2x8x8xf32>
    %35 = tpu.matmul %31, %17, %cst_24 {dimension_numbers = #tpu.dot_dimension_numbers<[2], [1], [1], [2], [0, 0, 0, 1, 1, 2], [0], [0]>} : vector<2x8x8xf32>, vector<2x8x8xf32>, vector<2x8x8xf32> -> vector<2x8x8xf32>
    "tpu.trace_stop"() : () -> ()
    %36 = vector.extract_strided_slice %13 {offsets = [0, 0, 8], sizes = [2, 8, 8], strides = [1, 1, 1]} : vector<2x8x96xf32> to vector<2x8x8xf32>
    %37 = vector.extract_strided_slice %13 {offsets = [0, 0, 40], sizes = [2, 8, 8], strides = [1, 1, 1]} : vector<2x8x96xf32> to vector<2x8x8xf32>
    %38 = vector.extract_strided_slice %13 {offsets = [0, 0, 72], sizes = [2, 8, 8], strides = [1, 1, 1]} : vector<2x8x96xf32> to vector<2x8x8xf32>
    "tpu.trace_start"() <{level = 10 : i32, message = "bqd,bkd->bqk"}> : () -> ()
    %cst_25 = arith.constant dense<0.000000e+00> : vector<2x8x8xf32>
    %39 = tpu.matmul %36, %37, %cst_25 {dimension_numbers = #tpu.dot_dimension_numbers<[2], [2], [1], [1], [0, 0, 0, 1, 1, 1], [0], [0]>} : vector<2x8x8xf32>, vector<2x8x8xf32>, vector<2x8x8xf32> -> vector<2x8x8xf32>
    "tpu.trace_stop"() : () -> ()
    %cst_26 = arith.constant 0.353553385 : f32
    %40 = vector.broadcast %cst_26 : f32 to vector<2x8x8xf32>
    %41 = arith.mulf %39, %40 : vector<2x8x8xf32>
    %42 = arith.addf %41, %14 : vector<2x8x8xf32>
    %cst_27 = arith.constant dense<0xFF800000> : vector<2x8xf32>
    %43 = vector.multi_reduction <maximumf>, %42, %cst_27 [2] : vector<2x8x8xf32> to vector<2x8xf32>
    %44 = vector.shape_cast %43 : vector<2x8xf32> to vector<2x8x1xf32>
    %45 = vector.broadcast %44 : vector<2x8x1xf32> to vector<2x8x8xf32>
    %46 = arith.subf %42, %45 : vector<2x8x8xf32>
    %47 = math.exp %46 : vector<2x8x8xf32>
    %cst_28 = arith.constant dense<0.000000e+00> : vector<2x8xf32>
    %48 = vector.multi_reduction <add>, %47, %cst_28 [2] : vector<2x8x8xf32> to vector<2x8xf32>
    %49 = vector.shape_cast %48 : vector<2x8xf32> to vector<2x8x1xf32>
    %50 = tpu.reciprocal %49 {approx = true} : vector<2x8x1xf32> -> vector<2x8x1xf32>
    %51 = vector.broadcast %50 : vector<2x8x1xf32> to vector<2x8x8xf32>
    %52 = arith.mulf %47, %51 : vector<2x8x8xf32>
    %c0_29 = arith.constant 0 : index
    %c1_30 = arith.constant 1 : index
    %c0_31 = arith.constant 0 : index
    %c0_32 = arith.constant 0 : index
    %53 = vector.load %arg11[%c0_29, %c1_30, %c0_31, %c0_32] : memref<2x4x8x8xf32, #tpu.memory_space<vmem>>, vector<2x1x8x8xf32>
    %54 = vector.shape_cast %53 : vector<2x1x8x8xf32> to vector<2x8x8xf32>
    %55 = vector.shape_cast %52 : vector<2x8x8xf32> to vector<2x1x8x8xf32>
    tpu.vector_store %arg11[%c0_29, %c1_30, %c0_31, %c0_32], %55 {strides = array<i32>} : memref<2x4x8x8xf32, #tpu.memory_space<vmem>>, vector<2x1x8x8xf32>,
    "tpu.trace_start"() <{level = 10 : i32, message = "bqk,bkd->bqd"}> : () -> ()
    %cst_33 = arith.constant dense<0.000000e+00> : vector<2x8x8xf32>
    %56 = tpu.matmul %52, %38, %cst_33 {dimension_numbers = #tpu.dot_dimension_numbers<[2], [1], [1], [2], [0, 0, 0, 1, 1, 2], [0], [0]>} : vector<2x8x8xf32>, vector<2x8x8xf32>, vector<2x8x8xf32> -> vector<2x8x8xf32>
    "tpu.trace_stop"() : () -> ()
    %57 = vector.extract_strided_slice %13 {offsets = [0, 0, 16], sizes = [2, 8, 8], strides = [1, 1, 1]} : vector<2x8x96xf32> to vector<2x8x8xf32>
    %58 = vector.extract_strided_slice %13 {offsets = [0, 0, 48], sizes = [2, 8, 8], strides = [1, 1, 1]} : vector<2x8x96xf32> to vector<2x8x8xf32>
    %59 = vector.extract_strided_slice %13 {offsets = [0, 0, 80], sizes = [2, 8, 8], strides = [1, 1, 1]} : vector<2x8x96xf32> to vector<2x8x8xf32>
    "tpu.trace_start"() <{level = 10 : i32, message = "bqd,bkd->bqk"}> : () -> ()
    %cst_34 = arith.constant dense<0.000000e+00> : vector<2x8x8xf32>
    %60 = tpu.matmul %57, %58, %cst_34 {dimension_numbers = #tpu.dot_dimension_numbers<[2], [2], [1], [1], [0, 0, 0, 1, 1, 1], [0], [0]>} : vector<2x8x8xf32>, vector<2x8x8xf32>, vector<2x8x8xf32> -> vector<2x8x8xf32>
    "tpu.trace_stop"() : () -> ()
    %cst_35 = arith.constant 0.353553385 : f32
    %61 = vector.broadcast %cst_35 : f32 to vector<2x8x8xf32>
    %62 = arith.mulf %60, %61 : vector<2x8x8xf32>
    %63 = arith.addf %62, %14 : vector<2x8x8xf32>
    %cst_36 = arith.constant dense<0xFF800000> : vector<2x8xf32>
    %64 = vector.multi_reduction <maximumf>, %63, %cst_36 [2] : vector<2x8x8xf32> to vector<2x8xf32>
    %65 = vector.shape_cast %64 : vector<2x8xf32> to vector<2x8x1xf32>
    %66 = vector.broadcast %65 : vector<2x8x1xf32> to vector<2x8x8xf32>
    %67 = arith.subf %63, %66 : vector<2x8x8xf32>
    %68 = math.exp %67 : vector<2x8x8xf32>
    %cst_37 = arith.constant dense<0.000000e+00> : vector<2x8xf32>
    %69 = vector.multi_reduction <add>, %68, %cst_37 [2] : vector<2x8x8xf32> to vector<2x8xf32>
    %70 = vector.shape_cast %69 : vector<2x8xf32> to vector<2x8x1xf32>
    %71 = tpu.reciprocal %70 {approx = true} : vector<2x8x1xf32> -> vector<2x8x1xf32>
    %72 = vector.broadcast %71 : vector<2x8x1xf32> to vector<2x8x8xf32>
    %73 = arith.mulf %68, %72 : vector<2x8x8xf32>
    %c0_38 = arith.constant 0 : index
    %c2_39 = arith.constant 2 : index
    %c0_40 = arith.constant 0 : index
    %c0_41 = arith.constant 0 : index
    %74 = vector.load %arg11[%c0_38, %c2_39, %c0_40, %c0_41] : memref<2x4x8x8xf32, #tpu.memory_space<vmem>>, vector<2x1x8x8xf32>
    %75 = vector.shape_cast %74 : vector<2x1x8x8xf32> to vector<2x8x8xf32>
    %76 = vector.shape_cast %73 : vector<2x8x8xf32> to vector<2x1x8x8xf32>
    tpu.vector_store %arg11[%c0_38, %c2_39, %c0_40, %c0_41], %76 {strides = array<i32>} : memref<2x4x8x8xf32, #tpu.memory_space<vmem>>, vector<2x1x8x8xf32>,
    "tpu.trace_start"() <{level = 10 : i32, message = "bqk,bkd->bqd"}> : () -> ()
    %cst_42 = arith.constant dense<0.000000e+00> : vector<2x8x8xf32>
    %77 = tpu.matmul %73, %59, %cst_42 {dimension_numbers = #tpu.dot_dimension_numbers<[2], [1], [1], [2], [0, 0, 0, 1, 1, 2], [0], [0]>} : vector<2x8x8xf32>, vector<2x8x8xf32>, vector<2x8x8xf32> -> vector<2x8x8xf32>
    "tpu.trace_stop"() : () -> ()
    %78 = vector.extract_strided_slice %13 {offsets = [0, 0, 24], sizes = [2, 8, 8], strides = [1, 1, 1]} : vector<2x8x96xf32> to vector<2x8x8xf32>
    %79 = vector.extract_strided_slice %13 {offsets = [0, 0, 56], sizes = [2, 8, 8], strides = [1, 1, 1]} : vector<2x8x96xf32> to vector<2x8x8xf32>
    %80 = vector.extract_strided_slice %13 {offsets = [0, 0, 88], sizes = [2, 8, 8], strides = [1, 1, 1]} : vector<2x8x96xf32> to vector<2x8x8xf32>
    "tpu.trace_start"() <{level = 10 : i32, message = "bqd,bkd->bqk"}> : () -> ()
    %cst_43 = arith.constant dense<0.000000e+00> : vector<2x8x8xf32>
    %81 = tpu.matmul %78, %79, %cst_43 {dimension_numbers = #tpu.dot_dimension_numbers<[2], [2], [1], [1], [0, 0, 0, 1, 1, 1], [0], [0]>} : vector<2x8x8xf32>, vector<2x8x8xf32>, vector<2x8x8xf32> -> vector<2x8x8xf32>
    "tpu.trace_stop"() : () -> ()
    %cst_44 = arith.constant 0.353553385 : f32
    %82 = vector.broadcast %cst_44 : f32 to vector<2x8x8xf32>
    %83 = arith.mulf %81, %82 : vector<2x8x8xf32>
    %84 = arith.addf %83, %14 : vector<2x8x8xf32>
    %cst_45 = arith.constant dense<0xFF800000> : vector<2x8xf32>
    %85 = vector.multi_reduction <maximumf>, %84, %cst_45 [2] : vector<2x8x8xf32> to vector<2x8xf32>
    %86 = vector.shape_cast %85 : vector<2x8xf32> to vector<2x8x1xf32>
    %87 = vector.broadcast %86 : vector<2x8x1xf32> to vector<2x8x8xf32>
    %88 = arith.subf %84, %87 : vector<2x8x8xf32>
    %89 = math.exp %88 : vector<2x8x8xf32>
    %cst_46 = arith.constant dense<0.000000e+00> : vector<2x8xf32>
    %90 = vector.multi_reduction <add>, %89, %cst_46 [2] : vector<2x8x8xf32> to vector<2x8xf32>
    %91 = vector.shape_cast %90 : vector<2x8xf32> to vector<2x8x1xf32>
    %92 = tpu.reciprocal %91 {approx = true} : vector<2x8x1xf32> -> vector<2x8x1xf32>
    %93 = vector.broadcast %92 : vector<2x8x1xf32> to vector<2x8x8xf32>
    %94 = arith.mulf %89, %93 : vector<2x8x8xf32>
    %c0_47 = arith.constant 0 : index
    %c3_48 = arith.constant 3 : index
    %c0_49 = arith.constant 0 : index
    %c0_50 = arith.constant 0 : index
    %95 = vector.load %arg11[%c0_47, %c3_48, %c0_49, %c0_50] : memref<2x4x8x8xf32, #tpu.memory_space<vmem>>, vector<2x1x8x8xf32>
    %96 = vector.shape_cast %95 : vector<2x1x8x8xf32> to vector<2x8x8xf32>
    %97 = vector.shape_cast %94 : vector<2x8x8xf32> to vector<2x1x8x8xf32>
    tpu.vector_store %arg11[%c0_47, %c3_48, %c0_49, %c0_50], %97 {strides = array<i32>} : memref<2x4x8x8xf32, #tpu.memory_space<vmem>>, vector<2x1x8x8xf32>,
    "tpu.trace_start"() <{level = 10 : i32, message = "bqk,bkd->bqd"}> : () -> ()
    %cst_51 = arith.constant dense<0.000000e+00> : vector<2x8x8xf32>
    %98 = tpu.matmul %94, %80, %cst_51 {dimension_numbers = #tpu.dot_dimension_numbers<[2], [1], [1], [2], [0, 0, 0, 1, 1, 2], [0], [0]>} : vector<2x8x8xf32>, vector<2x8x8xf32>, vector<2x8x8xf32> -> vector<2x8x8xf32>
    "tpu.trace_stop"() : () -> ()
    %99 = tpu.concatenate %35, %56, %77, %98 in 2 : vector<2x8x8xf32>, vector<2x8x8xf32>, vector<2x8x8xf32>, vector<2x8x8xf32> -> vector<2x8x32xf32>
    %100 = vector.shape_cast %99 : vector<2x8x32xf32> to vector<16x32xf32>
    %c0_52 = arith.constant 0 : index
    %c0_53 = arith.constant 0 : index
    %101 = vector.load %arg5[%c0_52, %c0_53] : memref<32x32xf32, #tpu.memory_space<vmem>>, vector<32x32xf32>
    %cst_54 = arith.constant dense<0.000000e+00> : vector<16x32xf32>
    %102 = tpu.matmul %100, %101, %cst_54 {dimension_numbers = #tpu.dot_dimension_numbers<[1], [0], [0], [1], [0, 0, 1, 1], [], []>} : vector<16x32xf32>, vector<32x32xf32>, vector<16x32xf32> -> vector<16x32xf32>
    %103 = vector.broadcast %2 : vector<1x32xf32> to vector<16x32xf32>
    %104 = arith.addf %102, %103 : vector<16x32xf32>
    %105 = arith.addf %1, %104 : vector<16x32xf32>
    %cst_55 = arith.constant dense<0.000000e+00> : vector<16xf32>
    %106 = vector.multi_reduction <add>, %105, %cst_55 [1] : vector<16x32xf32> to vector<16xf32>
    %107 = vector.shape_cast %106 : vector<16xf32> to vector<16x1xf32>
    %cst_56 = arith.constant 3.200000e+01 : f32
    %108 = vector.broadcast %cst_56 : f32 to vector<16x1xf32>
    %109 = arith.divf %107, %108 : vector<16x1xf32>
    %110 = vector.broadcast %109 : vector<16x1xf32> to vector<16x32xf32>
    %111 = arith.subf %105, %110 : vector<16x32xf32>
    %112 = arith.mulf %111, %111 : vector<16x32xf32>
    %cst_57 = arith.constant dense<0.000000e+00> : vector<16xf32>
    %113 = vector.multi_reduction <add>, %112, %cst_57 [1] : vector<16x32xf32> to vector<16xf32>
    %114 = vector.shape_cast %113 : vector<16xf32> to vector<16x1xf32>
    %cst_58 = arith.constant 3.200000e+01 : f32
    %115 = vector.broadcast %cst_58 : f32 to vector<16x1xf32>
    %116 = arith.divf %114, %115 : vector<16x1xf32>
    %cst_59 = arith.constant 9.99999974E-6 : f32
    %117 = vector.broadcast %cst_59 : f32 to vector<16x1xf32>
    %118 = arith.addf %116, %117 : vector<16x1xf32>
    %119 = math.rsqrt %118 : vector<16x1xf32>
    %120 = vector.broadcast %119 : vector<16x1xf32> to vector<16x32xf32>
    %121 = arith.mulf %111, %120 : vector<16x32xf32>
    %122 = vector.broadcast %3 : vector<1x32xf32> to vector<16x32xf32>
    %123 = arith.mulf %121, %122 : vector<16x32xf32>
    %124 = vector.broadcast %4 : vector<1x32xf32> to vector<16x32xf32>
    %125 = arith.addf %123, %124 : vector<16x32xf32>
    %c0_60 = arith.constant 0 : index
    %c0_61 = arith.constant 0 : index
    %126 = vector.load %arg6[%c0_60, %c0_61] : memref<32x64xf32, #tpu.memory_space<vmem>>, vector<32x64xf32>
    %cst_62 = arith.constant dense<0.000000e+00> : vector<16x64xf32>
    %127 = tpu.matmul %125, %126, %cst_62 {dimension_numbers = #tpu.dot_dimension_numbers<[1], [0], [0], [1], [0, 0, 1, 1], [], []>} : vector<16x32xf32>, vector<32x64xf32>, vector<16x64xf32> -> vector<16x64xf32>
    %c0_63 = arith.constant 0 : index
    %c0_64 = arith.constant 0 : index
    %128 = vector.load %arg7[%c0_63, %c0_64] : memref<1x64xf32, #tpu.memory_space<vmem>>, vector<1x64xf32>
    %129 = vector.broadcast %128 : vector<1x64xf32> to vector<16x64xf32>
    %130 = arith.addf %127, %129 : vector<16x64xf32>
    %cst_65 = arith.constant 0.000000e+00 : f32
    %131 = vector.broadcast %cst_65 : f32 to vector<16x64xf32>
    %132 = arith.maximumf %130, %131 : vector<16x64xf32>
    %c0_66 = arith.constant 0 : index
    %c0_67 = arith.constant 0 : index
    %133 = vector.load %arg8[%c0_66, %c0_67] : memref<64x32xf32, #tpu.memory_space<vmem>>, vector<64x32xf32>
    %cst_68 = arith.constant dense<0.000000e+00> : vector<16x32xf32>
    %134 = tpu.matmul %132, %133, %cst_68 {dimension_numbers = #tpu.dot_dimension_numbers<[1], [0], [0], [1], [0, 0, 1, 1], [], []>} : vector<16x64xf32>, vector<64x32xf32>, vector<16x32xf32> -> vector<16x32xf32>
    %135 = vector.broadcast %7 : vector<1x32xf32> to vector<16x32xf32>
    %136 = arith.addf %134, %135 : vector<16x32xf32>
    %137 = arith.addf %125, %136 : vector<16x32xf32>
    %cst_69 = arith.constant dense<0.000000e+00> : vector<16xf32>
    %138 = vector.multi_reduction <add>, %137, %cst_69 [1] : vector<16x32xf32> to vector<16xf32>
    %139 = vector.shape_cast %138 : vector<16xf32> to vector<16x1xf32>
    %cst_70 = arith.constant 3.200000e+01 : f32
    %140 = vector.broadcast %cst_70 : f32 to vector<16x1xf32>
    %141 = arith.divf %139, %140 : vector<16x1xf32>
    %142 = vector.broadcast %141 : vector<16x1xf32> to vector<16x32xf32>
    %143 = arith.subf %137, %142 : vector<16x32xf32>
    %144 = arith.mulf %143, %143 : vector<16x32xf32>
    %cst_71 = arith.constant dense<0.000000e+00> : vector<16xf32>
    %145 = vector.multi_reduction <add>, %144, %cst_71 [1] : vector<16x32xf32> to vector<16xf32>
    %146 = vector.shape_cast %145 : vector<16xf32> to vector<16x1xf32>
    %cst_72 = arith.constant 3.200000e+01 : f32
    %147 = vector.broadcast %cst_72 : f32 to vector<16x1xf32>
    %148 = arith.divf %146, %147 : vector<16x1xf32>
    %cst_73 = arith.constant 9.99999974E-6 : f32
    %149 = vector.broadcast %cst_73 : f32 to vector<16x1xf32>
    %150 = arith.addf %148, %149 : vector<16x1xf32>
    %151 = math.rsqrt %150 : vector<16x1xf32>
    %152 = vector.broadcast %151 : vector<16x1xf32> to vector<16x32xf32>
    %153 = arith.mulf %143, %152 : vector<16x32xf32>
    %154 = vector.broadcast %5 : vector<1x32xf32> to vector<16x32xf32>
    %155 = arith.mulf %153, %154 : vector<16x32xf32>
    %156 = vector.broadcast %6 : vector<1x32xf32> to vector<16x32xf32>
    %157 = arith.addf %155, %156 : vector<16x32xf32>
    %158 = vector.shape_cast %157 : vector<16x32xf32> to vector<2x8x32xf32>
    %c0_74 = arith.constant 0 : index
    %c0_75 = arith.constant 0 : index
    %c0_76 = arith.constant 0 : index
    %159 = vector.load %arg10[%c0_74, %c0_75, %c0_76] : memref<2x8x32xf32, #tpu.memory_space<vmem>>, vector<2x8x32xf32>
    tpu.vector_store %arg10[%c0_74, %c0_75, %c0_76], %158 {strides = array<i32>} : memref<2x8x32xf32, #tpu.memory_space<vmem>>, vector<2x8x32xf32>,
    return
  }
  func.func @transform_0(%arg0: i32) -> (i32, i32, i32) {
    %c0_i32 = arith.constant 0 : i32
    %c0_i32_0 = arith.constant 0 : i32
    %c0_i32_1 = arith.constant 0 : i32
    return %arg0, %c0_i32, %c0_i32_0 : i32, i32, i32
  }
  func.func @transform_1(%arg0: i32) -> (i32, i32, i32) {
    %c0_i32 = arith.constant 0 : i32
    %c0_i32_0 = arith.constant 0 : i32
    %c0_i32_1 = arith.constant 0 : i32
    return %arg0, %c0_i32, %c0_i32_0 : i32, i32, i32
  }
  func.func @transform_2(%arg0: i32) -> (i32, i32) {
    %c0_i32 = arith.constant 0 : i32
    %c0_i32_0 = arith.constant 0 : i32
    %c0_i32_1 = arith.constant 0 : i32
    return %c0_i32, %c0_i32_0 : i32, i32
  }
  func.func @transform_3(%arg0: i32) -> (i32, i32) {
    %c0_i32 = arith.constant 0 : i32
    %c0_i32_0 = arith.constant 0 : i32
    %c0_i32_1 = arith.constant 0 : i32
    return %c0_i32, %c0_i32_0 : i32, i32
  }
  func.func @transform_4(%arg0: i32) -> (i32, i32) {
    %c0_i32 = arith.constant 0 : i32
    %c0_i32_0 = arith.constant 0 : i32
    %c0_i32_1 = arith.constant 0 : i32
    return %c0_i32, %c0_i32_0 : i32, i32
  }
  func.func @transform_5(%arg0: i32) -> (i32, i32) {
    %c0_i32 = arith.constant 0 : i32
    %c0_i32_0 = arith.constant 0 : i32
    %c0_i32_1 = arith.constant 0 : i32
    return %c0_i32, %c0_i32_0 : i32, i32
  }
  func.func @transform_6(%arg0: i32) -> (i32, i32) {
    %c0_i32 = arith.constant 0 : i32
    %c0_i32_0 = arith.constant 0 : i32
    %c0_i32_1 = arith.constant 0 : i32
    return %c0_i32, %c0_i32_0 : i32, i32
  }
  func.func @transform_7(%arg0: i32) -> (i32, i32) {
    %c0_i32 = arith.constant 0 : i32
    %c0_i32_0 = arith.constant 0 : i32
    %c0_i32_1 = arith.constant 0 : i32
    return %c0_i32, %c0_i32_0 : i32, i32
  }
  func.func @transform_8(%arg0: i32) -> (i32, i32) {
    %c0_i32 = arith.constant 0 : i32
    %c0_i32_0 = arith.constant 0 : i32
    %c0_i32_1 = arith.constant 0 : i32
    return %c0_i32, %c0_i32_0 : i32, i32
  }
  func.func @transform_9(%arg0: i32) -> (i32, i32, i32) {
    %c0_i32 = arith.constant 0 : i32
    %c0_i32_0 = arith.constant 0 : i32
    %c0_i32_1 = arith.constant 0 : i32
    return %arg0, %c0_i32, %c0_i32_0 : i32, i32, i32
  }
  func.func @transform_10(%arg0: i32) -> (i32, i32, i32, i32) {
    %c0_i32 = arith.constant 0 : i32
    %c0_i32_0 = arith.constant 0 : i32
    %c0_i32_1 = arith.constant 0 : i32
    %c0_i32_2 = arith.constant 0 : i32
    return %arg0, %c0_i32, %c0_i32_0, %c0_i32_1 : i32, i32, i32, i32
  }
}

</mosaic_0001>

<llo_original>
// kernel: tpu_custom_call.1
$region0: #{tpu_custom_call.1}
  #allocation0 [shape = 'u32[]', space=smem, size = 0x4, offset = 0x4, fixed_abs, tag = 'smem constant byte address 0x4 - core index']
  #allocation1 [shape = 'u32[144,128]{1,0:T(1,128)}', space=vmem, size = 0x12000, scoped, tag = 'internal scratch']
  %s0 = inlined_call_operand.hbm [shape: f32[2,8,32], index: 0, kind: input, shape index: {}]
  %s1 = inlined_call_operand.hbm [shape: f32[2,8,8], index: 1, kind: input, shape index: {}]
  %s2 = inlined_call_operand.vmem [shape: f32[32,96], index: 2, kind: input, shape index: {}]
  %s3 = inlined_call_operand.vmem [shape: f32[1,96], index: 3, kind: input, shape index: {}]
  %s4 = inlined_call_operand.vmem [shape: f32[32,32], index: 4, kind: input, shape index: {}]
  %s5 = inlined_call_operand.vmem [shape: f32[32,64], index: 5, kind: input, shape index: {}]
  %s6 = inlined_call_operand.vmem [shape: f32[1,64], index: 6, kind: input, shape index: {}]
  %s7 = inlined_call_operand.vmem [shape: f32[64,32], index: 7, kind: input, shape index: {}]
  %s8 = inlined_call_operand.vmem [shape: f32[6,32], index: 8, kind: input, shape index: {}]
  %s9 = inlined_call_operand.hbm [shape: f32[2,8,32], index: 9, kind: output, shape index: {0}]
  %s10 = inlined_call_operand.hbm [shape: f32[2,4,8,8], index: 10, kind: output, shape index: {1}]
  %11 = xla_tuple %s9, %s10
  %s12 = sld [smem:[#allocation0]]
  $region62: #{tpu_custom_call.1} parent=0
    _
  %s14 = ssub.s32 1, %s12
  %s15 = scalar_select 0, %s14, %s12
  $region1: #{tpu_custom_call.1} parent=0
    #allocation2 [shape = 'u8[8192]{0}', space=vmem, size = 0x2000, scoped, tag = 'input window, operand 0, single buffered']
    #allocation3 [shape = 's32[1]{0}', space=sflag, size = 0x4, scoped, tag = 'scoped memory for tpu_custom_call.1']
    #allocation4 [shape = 's32[1]{0}', space=sflag, size = 0x4, scoped, tag = 'scoped memory for tpu_custom_call.1']
    #allocation5 [shape = 'u8[8192]{0}', space=vmem, size = 0x2000, scoped, tag = 'input window, operand 1, single buffered']
    #allocation6 [shape = 's32[1]{0}', space=sflag, size = 0x4, scoped, tag = 'scoped memory for tpu_custom_call.1']
    #allocation7 [shape = 'u8[8192]{0}', space=vmem, size = 0x2000, scoped, tag = 'output window, operand 0, single buffered']
    #allocation8 [shape = 'u8[32768]{0}', space=vmem, size = 0x8000, scoped, tag = 'output window, operand 1, single buffered']
    #allocation9 [shape = 's32[1]{0}', space=sflag, size = 0x4, scoped, tag = 'scoped memory for tpu_custom_call.1']
    %16 = vsyncpa [#allocation3], 0
    %17 = vsyncpa [#allocation6], 0
    %18 = vsyncpa [#allocation4], 0
    %19 = vsyncpa [#allocation9], 0
    // Predicated region
    $region2: #{tpu_custom_call.1} parent=1 // pred_check
      _
    $region3: #{tpu_custom_call.1} parent=1 // pred_check_branch
      %21 = sbr.rel (0) target = $region5
    $region4: #{tpu_custom_call.1} parent=1 // pred_region
      %s23 = ssub.s32 256, 256
      %24 = vsyncadd [#allocation3], %s23
      %s25 = sshll.u32 [#allocation2], 4
      %s26 = int_to_ptr.vmem [resolvable:$true] %s25
      %31 = dma.hbm_to_vmem [thread:$0]  %s0, 256, %s26, [#allocation3], 128, 128, 8
    $region5: #{tpu_custom_call.1} parent=1 // pred_fallthru
      _
    // Predicated region
    $region6: #{tpu_custom_call.1} parent=1 // pred_check
      _
    $region7: #{tpu_custom_call.1} parent=1 // pred_check_branch
      %33 = sbr.rel (0) target = $region9
    $region8: #{tpu_custom_call.1} parent=1 // pred_region
      %s35 = ssub.s32 256, 256
      %36 = vsyncadd [#allocation6], %s35
      %s37 = sshll.u32 [#allocation5], 4
      %s38 = int_to_ptr.vmem [resolvable:$true] %s37
      %43 = dma.hbm_to_vmem [thread:$0]  %s1, 256, %s38, [#allocation6], 128, 128, 8
    $region9: #{tpu_custom_call.1} parent=1 // pred_fallthru
      _
    // Predicated region
    $region10: #{tpu_custom_call.1} parent=1 // pred_check
      _
    $region11: #{tpu_custom_call.1} parent=1 // pred_check_branch
      %45 = sbr.rel (0) target = $region13
    $region12: #{tpu_custom_call.1} parent=1 // pred_region
      _
    $region13: #{tpu_custom_call.1} parent=1 // pred_fallthru
      _
    // Predicated region
    $region14: #{tpu_custom_call.1} parent=1 // pred_check
      _
    $region15: #{tpu_custom_call.1} parent=1 // pred_check_branch
      %47 = sbr.rel (0) target = $region17
    $region16: #{tpu_custom_call.1} parent=1 // pred_region
      _
    $region17: #{tpu_custom_call.1} parent=1 // pred_fallthru
      _
    // Predicated region
    $region18: #{tpu_custom_call.1} parent=1 // pred_check
      _
    $region19: #{tpu_custom_call.1} parent=1 // pred_check_branch
      %49 = sbr.rel (0) target = $region21
    $region20: #{tpu_custom_call.1} parent=1 // pred_region
      _
    $region21: #{tpu_custom_call.1} parent=1 // pred_fallthru
      _
    // Predicated region
    $region22: #{tpu_custom_call.1} parent=1 // pred_check
      _
    $region23: #{tpu_custom_call.1} parent=1 // pred_check_branch
      %51 = sbr.rel (0) target = $region25
    $region24: #{tpu_custom_call.1} parent=1 // pred_region
      _
    $region25: #{tpu_custom_call.1} parent=1 // pred_fallthru
      _
    // Predicated region
    $region26: #{tpu_custom_call.1} parent=1 // pred_check
      _
    $region27: #{tpu_custom_call.1} parent=1 // pred_check_branch
      %53 = sbr.rel (0) target = $region29
    $region28: #{tpu_custom_call.1} parent=1 // pred_region
      _
    $region29: #{tpu_custom_call.1} parent=1 // pred_fallthru
      _
    // Predicated region
    $region30: #{tpu_custom_call.1} parent=1 // pred_check
      _
    $region31: #{tpu_custom_call.1} parent=1 // pred_check_branch
      %55 = sbr.rel (0) target = $region33
    $region32: #{tpu_custom_call.1} parent=1 // pred_region
      _
    $region33: #{tpu_custom_call.1} parent=1 // pred_fallthru
      _
    // Predicated region
    $region34: #{tpu_custom_call.1} parent=1 // pred_check
      _
    $region35: #{tpu_custom_call.1} parent=1 // pred_check_branch
      %57 = sbr.rel (0) target = $region37
    $region36: #{tpu_custom_call.1} parent=1 // pred_region
      _
    $region37: #{tpu_custom_call.1} parent=1 // pred_fallthru
      _
    // Predicated region
    $region38: #{tpu_custom_call.1} parent=1 // pred_check
      _
    $region39: #{tpu_custom_call.1} parent=1 // pred_check_branch
      %59 = sbr.rel (0) target = $region41
    $region40: #{tpu_custom_call.1} parent=1 // pred_region
      %60 = dma.done [#allocation3], 256
    $region41: #{tpu_custom_call.1} parent=1 // pred_fallthru
      _
    // Predicated region
    $region42: #{tpu_custom_call.1} parent=1 // pred_check
      _
    $region43: #{tpu_custom_call.1} parent=1 // pred_check_branch
      %62 = sbr.rel (0) target = $region45
    $region44: #{tpu_custom_call.1} parent=1 // pred_region
      %63 = dma.done [#allocation6], 256
    $region45: #{tpu_custom_call.1} parent=1 // pred_fallthru
      _
    %v64 = vld [vmem:[#allocation2] sm:$0xff]
    %v65 = vld [vmem:[#allocation2 + $0x8] sm:$0xff]
    %v66 = vld [vmem:[%s8] sm:$0x1]
    %v67 = vld [vmem:[%s8 + $0x1] sm:$0x1]
    %v68 = vld [vmem:[%s8 + $0x2] sm:$0x1]
    %v69 = vld [vmem:[%s8 + $0x3] sm:$0x1]
    %v70 = vld [vmem:[%s8 + $0x4] sm:$0x1]
    %v71 = vld [vmem:[%s8 + $0x5] sm:$0x1]
    %v72 = vld [vmem:[%s2] sm:$0xff]
    %v73 = vld [vmem:[%s2 + $0x8] sm:$0xff]
    %v74 = vld [vmem:[%s2 + $0x10] sm:$0xff]
    %v75 = vld [vmem:[%s2 + $0x18] sm:$0xff]
    %v76 = vld [vmem:[%s3] sm:$0x1]
    %v78 = vlaneseq
    %v79 = vshrl.u32 %v78, 7
    %v80 = vsub.s32 0, %v79
    %v81 = vrot.slane %v76, %v80
    %vm83 = vcmask 261120
    %v85 = vsel %vm83, %v64, 0
    %v88 = vsel %vm83, %v65, 0
    %90 = vmatprep.subr.mxu0 0.0
    %91 = vmatpush1.msra.mxu0 %v72
    %92 = vmatprep.subr.mxu0 0.0
    %93 = vmatpush1.msra.mxu0 %v73
    %94 = vmatprep.subr.mxu0 0.0
    %95 = vmatpush1.msra.mxu0 %v74
    %96 = vmatprep.subr.mxu0 0.0
    %97 = vmatpush1.msra.mxu0 %v75
    %98 = vmatprep.subr.mxu0 0.0
    %99 = vmatpush1.msra.mxu0 0.0
    %100 = vmatprep.subr.mxu0 0.0
    %101 = vmatpush1.msra.mxu0 0.0
    %102 = vmatprep.subr.mxu0 0.0
    %103 = vmatpush1.msra.mxu0 0.0
    %104 = vmatprep.subr.mxu0 0.0
    %105 = vmatpush1.msra.mxu0 0.0
    %106 = vmatprep.subr.mxu0 0.0
    %107 = vmatpush1.msra.mxu0 0.0
    %108 = vmatprep.subr.mxu0 0.0
    %109 = vmatpush1.msra.mxu0 0.0
    %110 = vmatprep.subr.mxu0 0.0
    %111 = vmatpush1.msra.mxu0 0.0
    %112 = vmatprep.subr.mxu0 0.0
    %113 = vmatpush1.msra.mxu0 0.0
    %114 = vmatprep.subr.mxu0 0.0
    %115 = vmatpush1.msra.mxu0 0.0
    %116 = vmatprep.subr.mxu0 0.0
    %117 = vmatpush1.msra.mxu0 0.0
    %118 = vmatprep.subr.mxu0 0.0
    %119 = vmatpush1.msra.mxu0 0.0
    %120 = vmatprep.subr.mxu0 0.0
    %121 = vmatpush1.msra.mxu0 0.0
    %122 = vmatprep.subr.mxu0 0.0
    %123 = vmatpush1.msra.mxu0 0.0
    %124 = vmatprep.subr.mxu0 0.0
    %125 = vmatpush1.msra.mxu0 0.0
    %126 = vmatprep.subr.mxu0 0.0
    %127 = vmatpush1.msra.mxu0 0.0
    %128 = vmatprep.subr.mxu0 0.0
    %129 = vmatpush1.msra.mxu0 0.0
    %130 = vmatprep.subr.mxu0 0.0
    %131 = vmatpush1.msra.mxu0 0.0
    %132 = vmatprep.subr.mxu0 0.0
    %133 = vmatpush1.msra.mxu0 0.0
    %134 = vmatprep.subr.mxu0 0.0
    %135 = vmatpush1.msra.mxu0 0.0
    %136 = vmatprep.subr.mxu0 0.0
    %137 = vmatpush1.msra.mxu0 0.0
    %138 = vmatprep.subr.mxu0 0.0
    %139 = vmatpush1.msra.mxu0 0.0
    %140 = vmatprep.subr.mxu0 0.0
    %141 = vmatpush1.msra.mxu0 0.0
    %142 = vmatprep.subr.mxu0 0.0
    %143 = vmatpush1.msra.mxu0 0.0
    %144 = vmatprep.subr.mxu0 0.0
    %145 = vmatpush1.msra.mxu0 0.0
    %146 = vmatprep.subr.mxu0 0.0
    %147 = vmatpush1.msra.mxu0 0.0
    %148 = vmatprep.subr.mxu0 0.0
    %149 = vmatpush1.msra.mxu0 0.0
    %150 = vmatprep.subr.mxu0 0.0
    %151 = vmatpush1.msra.mxu0 0.0
    %152 = vmatprep.subr.mxu0 0.0
    %153 = vmatpush1.msra.mxu0 0.0
    %154 = vmatprep.mubr.f32.mxu0 0.0
    %155 = vmatmul.mubr.f32.gmra.mrb[0].mxu0 %v85
    %v156 = vpop.f32.mrb[0].mxu0
    %v157 = vadd.f32 %v81, %v156
    %v158 = vpop.f32.mrb[0].mxu0
    %159 = vmatprep.mubr.f32.mxu0 0.0
    %160 = vmatmul.mubr.f32.gmra.mrb[0].mxu0 %v88
    %v161 = vpop.f32.mrb[0].mxu0
    %v162 = vadd.f32 %v81, %v161
    %v163 = vpop.f32.mrb[0].mxu0
    %164 = vdwg.mxu0
    %v165 = vld [vmem:[#allocation5] sm:$0xff]
    %v166 = vld [vmem:[#allocation5 + $0x8] sm:$0xff]
    %168 = vrot.lane.b32.xlu0 %v157, 96
    %v169 = vpop.permute.xlu0 %168
    %vm170 = vcmask 64512
    %v171 = vsel %vm170, %v157, 0
    %v173 = vsel %vm170, %v169, 0
    %175 = vmatprep.subr.mxu0 0.0
    %176 = vmatpush1.xpose.msra.mxu0 %v173
    %177 = vmatprep.subr.mxu0 0.0
    %178 = vmatpush1.xpose.msra.mxu0 0.0
    %179 = vmatprep.subr.mxu0 0.0
    %180 = vmatpush1.xpose.msra.mxu0 0.0
    %181 = vmatprep.subr.mxu0 0.0
    %182 = vmatpush1.xpose.msra.mxu0 0.0
    %183 = vmatprep.subr.mxu0 0.0
    %184 = vmatpush1.xpose.msra.mxu0 0.0
    %185 = vmatprep.subr.mxu0 0.0
    %186 = vmatpush1.xpose.msra.mxu0 0.0
    %187 = vmatprep.subr.mxu0 0.0
    %188 = vmatpush1.xpose.msra.mxu0 0.0
    %189 = vmatprep.subr.mxu0 0.0
    %190 = vmatpush1.xpose.msra.mxu0 0.0
    %191 = vmatprep.subr.mxu0 0.0
    %192 = vmatpush1.xpose.msra.mxu0 0.0
    %193 = vmatprep.subr.mxu0 0.0
    %194 = vmatpush1.xpose.msra.mxu0 0.0
    %195 = vmatprep.subr.mxu0 0.0
    %196 = vmatpush1.xpose.msra.mxu0 0.0
    %197 = vmatprep.subr.mxu0 0.0
    %198 = vmatpush1.xpose.msra.mxu0 0.0
    %199 = vmatprep.subr.mxu0 0.0
    %200 = vmatpush1.xpose.msra.mxu0 0.0
    %201 = vmatprep.subr.mxu0 0.0
    %202 = vmatpush1.xpose.msra.mxu0 0.0
    %203 = vmatprep.subr.mxu0 0.0
    %204 = vmatpush1.xpose.msra.mxu0 0.0
    %205 = vmatprep.subr.mxu0 0.0
    %206 = vmatpush1.xpose.msra.mxu0 0.0
    %207 = vmatprep.subr.mxu0 0.0
    %208 = vmatpush1.xpose.msra.mxu0 0.0
    %209 = vmatprep.subr.mxu0 0.0
    %210 = vmatpush1.xpose.msra.mxu0 0.0
    %211 = vmatprep.subr.mxu0 0.0
    %212 = vmatpush1.xpose.msra.mxu0 0.0
    %213 = vmatprep.subr.mxu0 0.0
    %214 = vmatpush1.xpose.msra.mxu0 0.0
    %215 = vmatprep.subr.mxu0 0.0
    %216 = vmatpush1.xpose.msra.mxu0 0.0
    %217 = vmatprep.subr.mxu0 0.0
    %218 = vmatpush1.xpose.msra.mxu0 0.0
    %219 = vmatprep.subr.mxu0 0.0
    %220 = vmatpush1.xpose.msra.mxu0 0.0
    %221 = vmatprep.subr.mxu0 0.0
    %222 = vmatpush1.xpose.msra.mxu0 0.0
    %223 = vmatprep.subr.mxu0 0.0
    %224 = vmatpush1.xpose.msra.mxu0 0.0
    %225 = vmatprep.subr.mxu0 0.0
    %226 = vmatpush1.xpose.msra.mxu0 0.0
    %227 = vmatprep.subr.mxu0 0.0
    %228 = vmatpush1.xpose.msra.mxu0 0.0
    %229 = vmatprep.subr.mxu0 0.0
    %230 = vmatpush1.xpose.msra.mxu0 0.0
    %231 = vmatprep.subr.mxu0 0.0
    %232 = vmatpush1.xpose.msra.mxu0 0.0
    %233 = vmatprep.subr.mxu0 0.0
    %234 = vmatpush1.xpose.msra.mxu0 0.0
    %235 = vmatprep.subr.mxu0 0.0
    %236 = vmatpush1.xpose.msra.mxu0 0.0
    %237 = vmatprep.subr.mxu0 0.0
    %238 = vmatpush1.xpose.msra.mxu0 0.0
    %239 = vmatprep.mubr.f32.mxu0 0.0
    %240 = vmatmul.mubr.f32.gmra.mrb[0].mxu0 %v171
    %v241 = vpop.f32.mrb[0].mxu0
    %v242 = vadd.f32 0.0, %v241
    %v243 = vpop.f32.mrb[0].mxu0
    %244 = vdwg.mxu0
    %246 = vrot.lane.b32.xlu0 %v162, 96
    %v247 = vpop.permute.xlu0 %246
    %v248 = vsel %vm170, %v162, 0
    %v250 = vsel %vm170, %v247, 0
    %252 = vmatprep.subr.mxu0 0.0
    %253 = vmatpush1.xpose.msra.mxu0 %v250
    %254 = vmatprep.subr.mxu0 0.0
    %255 = vmatpush1.xpose.msra.mxu0 0.0
    %256 = vmatprep.subr.mxu0 0.0
    %257 = vmatpush1.xpose.msra.mxu0 0.0
    %258 = vmatprep.subr.mxu0 0.0
    %259 = vmatpush1.xpose.msra.mxu0 0.0
    %260 = vmatprep.subr.mxu0 0.0
    %261 = vmatpush1.xpose.msra.mxu0 0.0
    %262 = vmatprep.subr.mxu0 0.0
    %263 = vmatpush1.xpose.msra.mxu0 0.0
    %264 = vmatprep.subr.mxu0 0.0
    %265 = vmatpush1.xpose.msra.mxu0 0.0
    %266 = vmatprep.subr.mxu0 0.0
    %267 = vmatpush1.xpose.msra.mxu0 0.0
    %268 = vmatprep.subr.mxu0 0.0
    %269 = vmatpush1.xpose.msra.mxu0 0.0
    %270 = vmatprep.subr.mxu0 0.0
    %271 = vmatpush1.xpose.msra.mxu0 0.0
    %272 = vmatprep.subr.mxu0 0.0
    %273 = vmatpush1.xpose.msra.mxu0 0.0
    %274 = vmatprep.subr.mxu0 0.0
    %275 = vmatpush1.xpose.msra.mxu0 0.0
    %276 = vmatprep.subr.mxu0 0.0
    %277 = vmatpush1.xpose.msra.mxu0 0.0
    %278 = vmatprep.subr.mxu0 0.0
    %279 = vmatpush1.xpose.msra.mxu0 0.0
    %280 = vmatprep.subr.mxu0 0.0
    %281 = vmatpush1.xpose.msra.mxu0 0.0
    %282 = vmatprep.subr.mxu0 0.0
    %283 = vmatpush1.xpose.msra.mxu0 0.0
    %284 = vmatprep.subr.mxu0 0.0
    %285 = vmatpush1.xpose.msra.mxu0 0.0
    %286 = vmatprep.subr.mxu0 0.0
    %287 = vmatpush1.xpose.msra.mxu0 0.0
    %288 = vmatprep.subr.mxu0 0.0
    %289 = vmatpush1.xpose.msra.mxu0 0.0
    %290 = vmatprep.subr.mxu0 0.0
    %291 = vmatpush1.xpose.msra.mxu0 0.0
    %292 = vmatprep.subr.mxu0 0.0
    %293 = vmatpush1.xpose.msra.mxu0 0.0
    %294 = vmatprep.subr.mxu0 0.0
    %295 = vmatpush1.xpose.msra.mxu0 0.0
    %296 = vmatprep.subr.mxu0 0.0
    %297 = vmatpush1.xpose.msra.mxu0 0.0
    %298 = vmatprep.subr.mxu0 0.0
    %299 = vmatpush1.xpose.msra.mxu0 0.0
    %300 = vmatprep.subr.mxu0 0.0
    %301 = vmatpush1.xpose.msra.mxu0 0.0
    %302 = vmatprep.subr.mxu0 0.0
    %303 = vmatpush1.xpose.msra.mxu0 0.0
    %304 = vmatprep.subr.mxu0 0.0
    %305 = vmatpush1.xpose.msra.mxu0 0.0
    %306 = vmatprep.subr.mxu0 0.0
    %307 = vmatpush1.xpose.msra.mxu0 0.0
    %308 = vmatprep.subr.mxu0 0.0
    %309 = vmatpush1.xpose.msra.mxu0 0.0
    %310 = vmatprep.subr.mxu0 0.0
    %311 = vmatpush1.xpose.msra.mxu0 0.0
    %312 = vmatprep.subr.mxu0 0.0
    %313 = vmatpush1.xpose.msra.mxu0 0.0
    %314 = vmatprep.subr.mxu0 0.0
    %315 = vmatpush1.xpose.msra.mxu0 0.0
    %316 = vmatprep.mubr.f32.mxu0 0.0
    %317 = vmatmul.mubr.f32.gmra.mrb[0].mxu0 %v248
    %v318 = vpop.f32.mrb[0].mxu0
    %v319 = vadd.f32 0.0, %v318
    %v320 = vpop.f32.mrb[0].mxu0
    %321 = vdwg.mxu0
    %v322 = vmul.f32 %v242, 0.35355338
    %v323 = vmul.f32 %v319, 0.35355338
    %v324 = vadd.f32 %v322, %v165
    %v325 = vadd.f32 %v323, %v166
    %v326 = vsel %vm170, %v324, -inf
    %327 = vmax.xlane.f32.xlu0 %v326
    %v328 = vpop.xlane.xlu0 %327
    %v329 = vsel %vm170, %v325, -inf
    %330 = vmax.xlane.f32.xlu0 %v329
    %v331 = vpop.xlane.xlu0 %330
    %v332 = vsub.f32 %v324, %v328
    %v333 = vsub.f32 %v325, %v331
    %v334 = vmul.f32 %v332, 1.442695
    %v335 = vpow.pop %v334
    %v336 = vmul.f32 %v333, 1.442695
    %v337 = vpow.pop %v336
    %v338 = vsel %vm170, %v335, 0.0
    %339 = vadd.xlane.f32.xlu0 %v338
    %v340 = vpop.xlane.xlu0 %339
    %v341 = vsel %vm170, %v337, 0.0
    %342 = vadd.xlane.f32.xlu0 %v341
    %v343 = vpop.xlane.xlu0 %342
    %v344 = vrcp.pop %v340
    %v345 = vrcp.pop %v343
    %v346 = vmul.f32 %v335, %v344
    %v347 = vmul.f32 %v337, %v345
    %348 = vst.msk [vmem:[#allocation8] sm:$0xff] %vm170, %v346
    %349 = vst.msk [vmem:[#allocation8 + $0x20] sm:$0xff] %vm170, %v347
    %350 = vrot.lane.b32.xlu0 %v157, 64
    %v351 = vpop.permute.xlu0 %350
    %v354 = vsel %vm170, %v346, 0
    %356 = vmatprep.subr.mxu0 0.0
    %357 = vmatpush1.msra.mxu0 %v351
    %358 = vmatprep.subr.mxu0 0.0
    %359 = vmatpush1.msra.mxu0 0.0
    %360 = vmatprep.subr.mxu0 0.0
    %361 = vmatpush1.msra.mxu0 0.0
    %362 = vmatprep.subr.mxu0 0.0
    %363 = vmatpush1.msra.mxu0 0.0
    %364 = vmatprep.subr.mxu0 0.0
    %365 = vmatpush1.msra.mxu0 0.0
    %366 = vmatprep.subr.mxu0 0.0
    %367 = vmatpush1.msra.mxu0 0.0
    %368 = vmatprep.subr.mxu0 0.0
    %369 = vmatpush1.msra.mxu0 0.0
    %370 = vmatprep.subr.mxu0 0.0
    %371 = vmatpush1.msra.mxu0 0.0
    %372 = vmatprep.subr.mxu0 0.0
    %373 = vmatpush1.msra.mxu0 0.0
    %374 = vmatprep.subr.mxu0 0.0
    %375 = vmatpush1.msra.mxu0 0.0
    %376 = vmatprep.subr.mxu0 0.0
    %377 = vmatpush1.msra.mxu0 0.0
    %378 = vmatprep.subr.mxu0 0.0
    %379 = vmatpush1.msra.mxu0 0.0
    %380 = vmatprep.subr.mxu0 0.0
    %381 = vmatpush1.msra.mxu0 0.0
    %382 = vmatprep.subr.mxu0 0.0
    %383 = vmatpush1.msra.mxu0 0.0
    %384 = vmatprep.subr.mxu0 0.0
    %385 = vmatpush1.msra.mxu0 0.0
    %386 = vmatprep.subr.mxu0 0.0
    %387 = vmatpush1.msra.mxu0 0.0
    %388 = vmatprep.subr.mxu0 0.0
    %389 = vmatpush1.msra.mxu0 0.0
    %390 = vmatprep.subr.mxu0 0.0
    %391 = vmatpush1.msra.mxu0 0.0
    %392 = vmatprep.subr.mxu0 0.0
    %393 = vmatpush1.msra.mxu0 0.0
    %394 = vmatprep.subr.mxu0 0.0
    %395 = vmatpush1.msra.mxu0 0.0
    %396 = vmatprep.subr.mxu0 0.0
    %397 = vmatpush1.msra.mxu0 0.0
    %398 = vmatprep.subr.mxu0 0.0
    %399 = vmatpush1.msra.mxu0 0.0
    %400 = vmatprep.subr.mxu0 0.0
    %401 = vmatpush1.msra.mxu0 0.0
    %402 = vmatprep.subr.mxu0 0.0
    %403 = vmatpush1.msra.mxu0 0.0
    %404 = vmatprep.subr.mxu0 0.0
    %405 = vmatpush1.msra.mxu0 0.0
    %406 = vmatprep.subr.mxu0 0.0
    %407 = vmatpush1.msra.mxu0 0.0
    %408 = vmatprep.subr.mxu0 0.0
    %409 = vmatpush1.msra.mxu0 0.0
    %410 = vmatprep.subr.mxu0 0.0
    %411 = vmatpush1.msra.mxu0 0.0
    %412 = vmatprep.subr.mxu0 0.0
    %413 = vmatpush1.msra.mxu0 0.0
    %414 = vmatprep.subr.mxu0 0.0
    %415 = vmatpush1.msra.mxu0 0.0
    %416 = vmatprep.subr.mxu0 0.0
    %417 = vmatpush1.msra.mxu0 0.0
    %418 = vmatprep.subr.mxu0 0.0
    %419 = vmatpush1.msra.mxu0 0.0
    %420 = vmatprep.mubr.f32.mxu0 0.0
    %421 = vmatmul.mubr.f32.gmra.mrb[0].mxu0 %v354
    %v422 = vpop.f32.mrb[0].mxu0
    %v423 = vadd.f32 0.0, %v422
    %v424 = vpop.f32.mrb[0].mxu0
    %425 = vdwg.mxu0
    %426 = vrot.lane.b32.xlu0 %v162, 64
    %v427 = vpop.permute.xlu0 %426
    %v430 = vsel %vm170, %v347, 0
    %432 = vmatprep.subr.mxu0 0.0
    %433 = vmatpush1.msra.mxu0 %v427
    %434 = vmatprep.subr.mxu0 0.0
    %435 = vmatpush1.msra.mxu0 0.0
    %436 = vmatprep.subr.mxu0 0.0
    %437 = vmatpush1.msra.mxu0 0.0
    %438 = vmatprep.subr.mxu0 0.0
    %439 = vmatpush1.msra.mxu0 0.0
    %440 = vmatprep.subr.mxu0 0.0
    %441 = vmatpush1.msra.mxu0 0.0
    %442 = vmatprep.subr.mxu0 0.0
    %443 = vmatpush1.msra.mxu0 0.0
    %444 = vmatprep.subr.mxu0 0.0
    %445 = vmatpush1.msra.mxu0 0.0
    %446 = vmatprep.subr.mxu0 0.0
    %447 = vmatpush1.msra.mxu0 0.0
    %448 = vmatprep.subr.mxu0 0.0
    %449 = vmatpush1.msra.mxu0 0.0
    %450 = vmatprep.subr.mxu0 0.0
    %451 = vmatpush1.msra.mxu0 0.0
    %452 = vmatprep.subr.mxu0 0.0
    %453 = vmatpush1.msra.mxu0 0.0
    %454 = vmatprep.subr.mxu0 0.0
    %455 = vmatpush1.msra.mxu0 0.0
    %456 = vmatprep.subr.mxu0 0.0
    %457 = vmatpush1.msra.mxu0 0.0
    %458 = vmatprep.subr.mxu0 0.0
    %459 = vmatpush1.msra.mxu0 0.0
    %460 = vmatprep.subr.mxu0 0.0
    %461 = vmatpush1.msra.mxu0 0.0
    %462 = vmatprep.subr.mxu0 0.0
    %463 = vmatpush1.msra.mxu0 0.0
    %464 = vmatprep.subr.mxu0 0.0
    %465 = vmatpush1.msra.mxu0 0.0
    %466 = vmatprep.subr.mxu0 0.0
    %467 = vmatpush1.msra.mxu0 0.0
    %468 = vmatprep.subr.mxu0 0.0
    %469 = vmatpush1.msra.mxu0 0.0
    %470 = vmatprep.subr.mxu0 0.0
    %471 = vmatpush1.msra.mxu0 0.0
    %472 = vmatprep.subr.mxu0 0.0
    %473 = vmatpush1.msra.mxu0 0.0
    %474 = vmatprep.subr.mxu0 0.0
    %475 = vmatpush1.msra.mxu0 0.0
    %476 = vmatprep.subr.mxu0 0.0
    %477 = vmatpush1.msra.mxu0 0.0
    %478 = vmatprep.subr.mxu0 0.0
    %479 = vmatpush1.msra.mxu0 0.0
    %480 = vmatprep.subr.mxu0 0.0
    %481 = vmatpush1.msra.mxu0 0.0
    %482 = vmatprep.subr.mxu0 0.0
    %483 = vmatpush1.msra.mxu0 0.0
    %484 = vmatprep.subr.mxu0 0.0
    %485 = vmatpush1.msra.mxu0 0.0
    %486 = vmatprep.subr.mxu0 0.0
    %487 = vmatpush1.msra.mxu0 0.0
    %488 = vmatprep.subr.mxu0 0.0
    %489 = vmatpush1.msra.mxu0 0.0
    %490 = vmatprep.subr.mxu0 0.0
    %491 = vmatpush1.msra.mxu0 0.0
    %492 = vmatprep.subr.mxu0 0.0
    %493 = vmatpush1.msra.mxu0 0.0
    %494 = vmatprep.subr.mxu0 0.0
    %495 = vmatpush1.msra.mxu0 0.0
    %496 = vmatprep.mubr.f32.mxu0 0.0
    %497 = vmatmul.mubr.f32.gmra.mrb[0].mxu0 %v430
    %v498 = vpop.f32.mrb[0].mxu0
    %v499 = vadd.f32 0.0, %v498
    %v500 = vpop.f32.mrb[0].mxu0
    %501 = vdwg.mxu0
    %502 = vrot.lane.b32.xlu0 %v157, 120
    %v503 = vpop.permute.xlu0 %502
    %504 = vrot.lane.b32.xlu0 %v157, 88
    %v505 = vpop.permute.xlu0 %504
    %v506 = vsel %vm170, %v503, 0
    %v508 = vsel %vm170, %v505, 0
    %510 = vmatprep.subr.mxu0 0.0
    %511 = vmatpush1.xpose.msra.mxu0 %v508
    %512 = vmatprep.subr.mxu0 0.0
    %513 = vmatpush1.xpose.msra.mxu0 0.0
    %514 = vmatprep.subr.mxu0 0.0
    %515 = vmatpush1.xpose.msra.mxu0 0.0
    %516 = vmatprep.subr.mxu0 0.0
    %517 = vmatpush1.xpose.msra.mxu0 0.0
    %518 = vmatprep.subr.mxu0 0.0
    %519 = vmatpush1.xpose.msra.mxu0 0.0
    %520 = vmatprep.subr.mxu0 0.0
    %521 = vmatpush1.xpose.msra.mxu0 0.0
    %522 = vmatprep.subr.mxu0 0.0
    %523 = vmatpush1.xpose.msra.mxu0 0.0
    %524 = vmatprep.subr.mxu0 0.0
    %525 = vmatpush1.xpose.msra.mxu0 0.0
    %526 = vmatprep.subr.mxu0 0.0
    %527 = vmatpush1.xpose.msra.mxu0 0.0
    %528 = vmatprep.subr.mxu0 0.0
    %529 = vmatpush1.xpose.msra.mxu0 0.0
    %530 = vmatprep.subr.mxu0 0.0
    %531 = vmatpush1.xpose.msra.mxu0 0.0
    %532 = vmatprep.subr.mxu0 0.0
    %533 = vmatpush1.xpose.msra.mxu0 0.0
    %534 = vmatprep.subr.mxu0 0.0
    %535 = vmatpush1.xpose.msra.mxu0 0.0
    %536 = vmatprep.subr.mxu0 0.0
    %537 = vmatpush1.xpose.msra.mxu0 0.0
    %538 = vmatprep.subr.mxu0 0.0
    %539 = vmatpush1.xpose.msra.mxu0 0.0
    %540 = vmatprep.subr.mxu0 0.0
    %541 = vmatpush1.xpose.msra.mxu0 0.0
    %542 = vmatprep.subr.mxu0 0.0
    %543 = vmatpush1.xpose.msra.mxu0 0.0
    %544 = vmatprep.subr.mxu0 0.0
    %545 = vmatpush1.xpose.msra.mxu0 0.0
    %546 = vmatprep.subr.mxu0 0.0
    %547 = vmatpush1.xpose.msra.mxu0 0.0
    %548 = vmatprep.subr.mxu0 0.0
    %549 = vmatpush1.xpose.msra.mxu0 0.0
    %550 = vmatprep.subr.mxu0 0.0
    %551 = vmatpush1.xpose.msra.mxu0 0.0
    %552 = vmatprep.subr.mxu0 0.0
    %553 = vmatpush1.xpose.msra.mxu0 0.0
    %554 = vmatprep.subr.mxu0 0.0
    %555 = vmatpush1.xpose.msra.mxu0 0.0
    %556 = vmatprep.subr.mxu0 0.0
    %557 = vmatpush1.xpose.msra.mxu0 0.0
    %558 = vmatprep.subr.mxu0 0.0
    %559 = vmatpush1.xpose.msra.mxu0 0.0
    %560 = vmatprep.subr.mxu0 0.0
    %561 = vmatpush1.xpose.msra.mxu0 0.0
    %562 = vmatprep.subr.mxu0 0.0
    %563 = vmatpush1.xpose.msra.mxu0 0.0
    %564 = vmatprep.subr.mxu0 0.0
    %565 = vmatpush1.xpose.msra.mxu0 0.0
    %566 = vmatprep.subr.mxu0 0.0
    %567 = vmatpush1.xpose.msra.mxu0 0.0
    %568 = vmatprep.subr.mxu0 0.0
    %569 = vmatpush1.xpose.msra.mxu0 0.0
    %570 = vmatprep.subr.mxu0 0.0
    %571 = vmatpush1.xpose.msra.mxu0 0.0
    %572 = vmatprep.subr.mxu0 0.0
    %573 = vmatpush1.xpose.msra.mxu0 0.0
    %574 = vmatprep.mubr.f32.mxu0 0.0
    %575 = vmatmul.mubr.f32.gmra.mrb[0].mxu0 %v506
    %v576 = vpop.f32.mrb[0].mxu0
    %v577 = vadd.f32 0.0, %v576
    %v578 = vpop.f32.mrb[0].mxu0
    %579 = vdwg.mxu0
    %580 = vrot.lane.b32.xlu0 %v162, 120
    %v581 = vpop.permute.xlu0 %580
    %582 = vrot.lane.b32.xlu0 %v162, 88
    %v583 = vpop.permute.xlu0 %582
    %v584 = vsel %vm170, %v581, 0
    %v586 = vsel %vm170, %v583, 0
    %588 = vmatprep.subr.mxu0 0.0
    %589 = vmatpush1.xpose.msra.mxu0 %v586
    %590 = vmatprep.subr.mxu0 0.0
    %591 = vmatpush1.xpose.msra.mxu0 0.0
    %592 = vmatprep.subr.mxu0 0.0
    %593 = vmatpush1.xpose.msra.mxu0 0.0
    %594 = vmatprep.subr.mxu0 0.0
    %595 = vmatpush1.xpose.msra.mxu0 0.0
    %596 = vmatprep.subr.mxu0 0.0
    %597 = vmatpush1.xpose.msra.mxu0 0.0
    %598 = vmatprep.subr.mxu0 0.0
    %599 = vmatpush1.xpose.msra.mxu0 0.0
    %600 = vmatprep.subr.mxu0 0.0
    %601 = vmatpush1.xpose.msra.mxu0 0.0
    %602 = vmatprep.subr.mxu0 0.0
    %603 = vmatpush1.xpose.msra.mxu0 0.0
    %604 = vmatprep.subr.mxu0 0.0
    %605 = vmatpush1.xpose.msra.mxu0 0.0
    %606 = vmatprep.subr.mxu0 0.0
    %607 = vmatpush1.xpose.msra.mxu0 0.0
    %608 = vmatprep.subr.mxu0 0.0
    %609 = vmatpush1.xpose.msra.mxu0 0.0
    %610 = vmatprep.subr.mxu0 0.0
    %611 = vmatpush1.xpose.msra.mxu0 0.0
    %612 = vmatprep.subr.mxu0 0.0
    %613 = vmatpush1.xpose.msra.mxu0 0.0
    %614 = vmatprep.subr.mxu0 0.0
    %615 = vmatpush1.xpose.msra.mxu0 0.0
    %616 = vmatprep.subr.mxu0 0.0
    %617 = vmatpush1.xpose.msra.mxu0 0.0
    %618 = vmatprep.subr.mxu0 0.0
    %619 = vmatpush1.xpose.msra.mxu0 0.0
    %620 = vmatprep.subr.mxu0 0.0
    %621 = vmatpush1.xpose.msra.mxu0 0.0
    %622 = vmatprep.subr.mxu0 0.0
    %623 = vmatpush1.xpose.msra.mxu0 0.0
    %624 = vmatprep.subr.mxu0 0.0
    %625 = vmatpush1.xpose.msra.mxu0 0.0
    %626 = vmatprep.subr.mxu0 0.0
    %627 = vmatpush1.xpose.msra.mxu0 0.0
    %628 = vmatprep.subr.mxu0 0.0
    %629 = vmatpush1.xpose.msra.mxu0 0.0
    %630 = vmatprep.subr.mxu0 0.0
    %631 = vmatpush1.xpose.msra.mxu0 0.0
    %632 = vmatprep.subr.mxu0 0.0
    %633 = vmatpush1.xpose.msra.mxu0 0.0
    %634 = vmatprep.subr.mxu0 0.0
    %635 = vmatpush1.xpose.msra.mxu0 0.0
    %636 = vmatprep.subr.mxu0 0.0
    %637 = vmatpush1.xpose.msra.mxu0 0.0
    %638 = vmatprep.subr.mxu0 0.0
    %639 = vmatpush1.xpose.msra.mxu0 0.0
    %640 = vmatprep.subr.mxu0 0.0
    %641 = vmatpush1.xpose.msra.mxu0 0.0
    %642 = vmatprep.subr.mxu0 0.0
    %643 = vmatpush1.xpose.msra.mxu0 0.0
    %644 = vmatprep.subr.mxu0 0.0
    %645 = vmatpush1.xpose.msra.mxu0 0.0
    %646 = vmatprep.subr.mxu0 0.0
    %647 = vmatpush1.xpose.msra.mxu0 0.0
    %648 = vmatprep.subr.mxu0 0.0
    %649 = vmatpush1.xpose.msra.mxu0 0.0
    %650 = vmatprep.subr.mxu0 0.0
    %651 = vmatpush1.xpose.msra.mxu0 0.0
    %652 = vmatprep.mubr.f32.mxu0 0.0
    %653 = vmatmul.mubr.f32.gmra.mrb[0].mxu0 %v584
    %v654 = vpop.f32.mrb[0].mxu0
    %v655 = vadd.f32 0.0, %v654
    %v656 = vpop.f32.mrb[0].mxu0
    %657 = vdwg.mxu0
    %v658 = vmul.f32 %v577, 0.35355338
    %v659 = vmul.f32 %v655, 0.35355338
    %v660 = vadd.f32 %v658, %v165
    %v661 = vadd.f32 %v659, %v166
    %v662 = vsel %vm170, %v660, -inf
    %663 = vmax.xlane.f32.xlu0 %v662
    %v664 = vpop.xlane.xlu0 %663
    %v665 = vsel %vm170, %v661, -inf
    %666 = vmax.xlane.f32.xlu0 %v665
    %v667 = vpop.xlane.xlu0 %666
    %v668 = vsub.f32 %v660, %v664
    %v669 = vsub.f32 %v661, %v667
    %v670 = vmul.f32 %v668, 1.442695
    %v671 = vpow.pop %v670
    %v672 = vmul.f32 %v669, 1.442695
    %v673 = vpow.pop %v672
    %v674 = vsel %vm170, %v671, 0.0
    %675 = vadd.xlane.f32.xlu0 %v674
    %v676 = vpop.xlane.xlu0 %675
    %v677 = vsel %vm170, %v673, 0.0
    %678 = vadd.xlane.f32.xlu0 %v677
    %v679 = vpop.xlane.xlu0 %678
    %v680 = vrcp.pop %v676
    %v681 = vrcp.pop %v679
    %v682 = vmul.f32 %v671, %v680
    %v683 = vmul.f32 %v673, %v681
    %s684 = scalar_lea.vmem [#allocation8], 8
    %685 = vst.msk [vmem:[%s684] sm:$0xff] %vm170, %v682
    %686 = vst.msk [vmem:[%s684 + $0x20] sm:$0xff] %vm170, %v683
    %687 = vrot.lane.b32.xlu0 %v157, 56
    %v688 = vpop.permute.xlu0 %687
    %v691 = vsel %vm170, %v682, 0
    %693 = vmatprep.subr.mxu0 0.0
    %694 = vmatpush1.msra.mxu0 %v688
    %695 = vmatprep.subr.mxu0 0.0
    %696 = vmatpush1.msra.mxu0 0.0
    %697 = vmatprep.subr.mxu0 0.0
    %698 = vmatpush1.msra.mxu0 0.0
    %699 = vmatprep.subr.mxu0 0.0
    %700 = vmatpush1.msra.mxu0 0.0
    %701 = vmatprep.subr.mxu0 0.0
    %702 = vmatpush1.msra.mxu0 0.0
    %703 = vmatprep.subr.mxu0 0.0
    %704 = vmatpush1.msra.mxu0 0.0
    %705 = vmatprep.subr.mxu0 0.0
    %706 = vmatpush1.msra.mxu0 0.0
    %707 = vmatprep.subr.mxu0 0.0
    %708 = vmatpush1.msra.mxu0 0.0
    %709 = vmatprep.subr.mxu0 0.0
    %710 = vmatpush1.msra.mxu0 0.0
    %711 = vmatprep.subr.mxu0 0.0
    %712 = vmatpush1.msra.mxu0 0.0
    %713 = vmatprep.subr.mxu0 0.0
    %714 = vmatpush1.msra.mxu0 0.0
    %715 = vmatprep.subr.mxu0 0.0
    %716 = vmatpush1.msra.mxu0 0.0
    %717 = vmatprep.subr.mxu0 0.0
    %718 = vmatpush1.msra.mxu0 0.0
    %719 = vmatprep.subr.mxu0 0.0
    %720 = vmatpush1.msra.mxu0 0.0
    %721 = vmatprep.subr.mxu0 0.0
    %722 = vmatpush1.msra.mxu0 0.0
    %723 = vmatprep.subr.mxu0 0.0
    %724 = vmatpush1.msra.mxu0 0.0
    %725 = vmatprep.subr.mxu0 0.0
    %726 = vmatpush1.msra.mxu0 0.0
    %727 = vmatprep.subr.mxu0 0.0
    %728 = vmatpush1.msra.mxu0 0.0
    %729 = vmatprep.subr.mxu0 0.0
    %730 = vmatpush1.msra.mxu0 0.0
    %731 = vmatprep.subr.mxu0 0.0
    %732 = vmatpush1.msra.mxu0 0.0
    %733 = vmatprep.subr.mxu0 0.0
    %734 = vmatpush1.msra.mxu0 0.0
    %735 = vmatprep.subr.mxu0 0.0
    %736 = vmatpush1.msra.mxu0 0.0
    %737 = vmatprep.subr.mxu0 0.0
    %738 = vmatpush1.msra.mxu0 0.0
    %739 = vmatprep.subr.mxu0 0.0
    %740 = vmatpush1.msra.mxu0 0.0
    %741 = vmatprep.subr.mxu0 0.0
    %742 = vmatpush1.msra.mxu0 0.0
    %743 = vmatprep.subr.mxu0 0.0
    %744 = vmatpush1.msra.mxu0 0.0
    %745 = vmatprep.subr.mxu0 0.0
    %746 = vmatpush1.msra.mxu0 0.0
    %747 = vmatprep.subr.mxu0 0.0
    %748 = vmatpush1.msra.mxu0 0.0
    %749 = vmatprep.subr.mxu0 0.0
    %750 = vmatpush1.msra.mxu0 0.0
    %751 = vmatprep.subr.mxu0 0.0
    %752 = vmatpush1.msra.mxu0 0.0
    %753 = vmatprep.subr.mxu0 0.0
    %754 = vmatpush1.msra.mxu0 0.0
    %755 = vmatprep.subr.mxu0 0.0
    %756 = vmatpush1.msra.mxu0 0.0
    %757 = vmatprep.mubr.f32.mxu0 0.0
    %758 = vmatmul.mubr.f32.gmra.mrb[0].mxu0 %v691
    %v759 = vpop.f32.mrb[0].mxu0
    %v760 = vadd.f32 0.0, %v759
    %v761 = vpop.f32.mrb[0].mxu0
    %762 = vdwg.mxu0
    %763 = vrot.lane.b32.xlu0 %v162, 56
    %v764 = vpop.permute.xlu0 %763
    %v767 = vsel %vm170, %v683, 0
    %769 = vmatprep.subr.mxu0 0.0
    %770 = vmatpush1.msra.mxu0 %v764
    %771 = vmatprep.subr.mxu0 0.0
    %772 = vmatpush1.msra.mxu0 0.0
    %773 = vmatprep.subr.mxu0 0.0
    %774 = vmatpush1.msra.mxu0 0.0
    %775 = vmatprep.subr.mxu0 0.0
    %776 = vmatpush1.msra.mxu0 0.0
    %777 = vmatprep.subr.mxu0 0.0
    %778 = vmatpush1.msra.mxu0 0.0
    %779 = vmatprep.subr.mxu0 0.0
    %780 = vmatpush1.msra.mxu0 0.0
    %781 = vmatprep.subr.mxu0 0.0
    %782 = vmatpush1.msra.mxu0 0.0
    %783 = vmatprep.subr.mxu0 0.0
    %784 = vmatpush1.msra.mxu0 0.0
    %785 = vmatprep.subr.mxu0 0.0
    %786 = vmatpush1.msra.mxu0 0.0
    %787 = vmatprep.subr.mxu0 0.0
    %788 = vmatpush1.msra.mxu0 0.0
    %789 = vmatprep.subr.mxu0 0.0
    %790 = vmatpush1.msra.mxu0 0.0
    %791 = vmatprep.subr.mxu0 0.0
    %792 = vmatpush1.msra.mxu0 0.0
    %793 = vmatprep.subr.mxu0 0.0
    %794 = vmatpush1.msra.mxu0 0.0
    %795 = vmatprep.subr.mxu0 0.0
    %796 = vmatpush1.msra.mxu0 0.0
    %797 = vmatprep.subr.mxu0 0.0
    %798 = vmatpush1.msra.mxu0 0.0
    %799 = vmatprep.subr.mxu0 0.0
    %800 = vmatpush1.msra.mxu0 0.0
    %801 = vmatprep.subr.mxu0 0.0
    %802 = vmatpush1.msra.mxu0 0.0
    %803 = vmatprep.subr.mxu0 0.0
    %804 = vmatpush1.msra.mxu0 0.0
    %805 = vmatprep.subr.mxu0 0.0
    %806 = vmatpush1.msra.mxu0 0.0
    %807 = vmatprep.subr.mxu0 0.0
    %808 = vmatpush1.msra.mxu0 0.0
    %809 = vmatprep.subr.mxu0 0.0
    %810 = vmatpush1.msra.mxu0 0.0
    %811 = vmatprep.subr.mxu0 0.0
    %812 = vmatpush1.msra.mxu0 0.0
    %813 = vmatprep.subr.mxu0 0.0
    %814 = vmatpush1.msra.mxu0 0.0
    %815 = vmatprep.subr.mxu0 0.0
    %816 = vmatpush1.msra.mxu0 0.0
    %817 = vmatprep.subr.mxu0 0.0
    %818 = vmatpush1.msra.mxu0 0.0
    %819 = vmatprep.subr.mxu0 0.0
    %820 = vmatpush1.msra.mxu0 0.0
    %821 = vmatprep.subr.mxu0 0.0
    %822 = vmatpush1.msra.mxu0 0.0
    %823 = vmatprep.subr.mxu0 0.0
    %824 = vmatpush1.msra.mxu0 0.0
    %825 = vmatprep.subr.mxu0 0.0
    %826 = vmatpush1.msra.mxu0 0.0
    %827 = vmatprep.subr.mxu0 0.0
    %828 = vmatpush1.msra.mxu0 0.0
    %829 = vmatprep.subr.mxu0 0.0
    %830 = vmatpush1.msra.mxu0 0.0
    %831 = vmatprep.subr.mxu0 0.0
    %832 = vmatpush1.msra.mxu0 0.0
    %833 = vmatprep.mubr.f32.mxu0 0.0
    %834 = vmatmul.mubr.f32.gmra.mrb[0].mxu0 %v767
    %v835 = vpop.f32.mrb[0].mxu0
    %v836 = vadd.f32 0.0, %v835
    %v837 = vpop.f32.mrb[0].mxu0
    %838 = vdwg.mxu0
    %839 = vrot.lane.b32.xlu0 %v157, 112
    %v840 = vpop.permute.xlu0 %839
    %841 = vrot.lane.b32.xlu0 %v157, 80
    %v842 = vpop.permute.xlu0 %841
    %v843 = vsel %vm170, %v840, 0
    %v845 = vsel %vm170, %v842, 0
    %847 = vmatprep.subr.mxu0 0.0
    %848 = vmatpush1.xpose.msra.mxu0 %v845
    %849 = vmatprep.subr.mxu0 0.0
    %850 = vmatpush1.xpose.msra.mxu0 0.0
    %851 = vmatprep.subr.mxu0 0.0
    %852 = vmatpush1.xpose.msra.mxu0 0.0
    %853 = vmatprep.subr.mxu0 0.0
    %854 = vmatpush1.xpose.msra.mxu0 0.0
    %855 = vmatprep.subr.mxu0 0.0
    %856 = vmatpush1.xpose.msra.mxu0 0.0
    %857 = vmatprep.subr.mxu0 0.0
    %858 = vmatpush1.xpose.msra.mxu0 0.0
    %859 = vmatprep.subr.mxu0 0.0
    %860 = vmatpush1.xpose.msra.mxu0 0.0
    %861 = vmatprep.subr.mxu0 0.0
    %862 = vmatpush1.xpose.msra.mxu0 0.0
    %863 = vmatprep.subr.mxu0 0.0
    %864 = vmatpush1.xpose.msra.mxu0 0.0
    %865 = vmatprep.subr.mxu0 0.0
    %866 = vmatpush1.xpose.msra.mxu0 0.0
    %867 = vmatprep.subr.mxu0 0.0
    %868 = vmatpush1.xpose.msra.mxu0 0.0
    %869 = vmatprep.subr.mxu0 0.0
    %870 = vmatpush1.xpose.msra.mxu0 0.0
    %871 = vmatprep.subr.mxu0 0.0
    %872 = vmatpush1.xpose.msra.mxu0 0.0
    %873 = vmatprep.subr.mxu0 0.0
    %874 = vmatpush1.xpose.msra.mxu0 0.0
    %875 = vmatprep.subr.mxu0 0.0
    %876 = vmatpush1.xpose.msra.mxu0 0.0
    %877 = vmatprep.subr.mxu0 0.0
    %878 = vmatpush1.xpose.msra.mxu0 0.0
    %879 = vmatprep.subr.mxu0 0.0
    %880 = vmatpush1.xpose.msra.mxu0 0.0
    %881 = vmatprep.subr.mxu0 0.0
    %882 = vmatpush1.xpose.msra.mxu0 0.0
    %883 = vmatprep.subr.mxu0 0.0
    %884 = vmatpush1.xpose.msra.mxu0 0.0
    %885 = vmatprep.subr.mxu0 0.0
    %886 = vmatpush1.xpose.msra.mxu0 0.0
    %887 = vmatprep.subr.mxu0 0.0
    %888 = vmatpush1.xpose.msra.mxu0 0.0
    %889 = vmatprep.subr.mxu0 0.0
    %890 = vmatpush1.xpose.msra.mxu0 0.0
    %891 = vmatprep.subr.mxu0 0.0
    %892 = vmatpush1.xpose.msra.mxu0 0.0
    %893 = vmatprep.subr.mxu0 0.0
    %894 = vmatpush1.xpose.msra.mxu0 0.0
    %895 = vmatprep.subr.mxu0 0.0
    %896 = vmatpush1.xpose.msra.mxu0 0.0
    %897 = vmatprep.subr.mxu0 0.0
    %898 = vmatpush1.xpose.msra.mxu0 0.0
    %899 = vmatprep.subr.mxu0 0.0
    %900 = vmatpush1.xpose.msra.mxu0 0.0
    %901 = vmatprep.subr.mxu0 0.0
    %902 = vmatpush1.xpose.msra.mxu0 0.0
    %903 = vmatprep.subr.mxu0 0.0
    %904 = vmatpush1.xpose.msra.mxu0 0.0
    %905 = vmatprep.subr.mxu0 0.0
    %906 = vmatpush1.xpose.msra.mxu0 0.0
    %907 = vmatprep.subr.mxu0 0.0
    %908 = vmatpush1.xpose.msra.mxu0 0.0
    %909 = vmatprep.subr.mxu0 0.0
    %910 = vmatpush1.xpose.msra.mxu0 0.0
    %911 = vmatprep.mubr.f32.mxu0 0.0
    %912 = vmatmul.mubr.f32.gmra.mrb[0].mxu0 %v843
    %v913 = vpop.f32.mrb[0].mxu0
    %v914 = vadd.f32 0.0, %v913
    %v915 = vpop.f32.mrb[0].mxu0
    %916 = vdwg.mxu0
    %917 = vrot.lane.b32.xlu0 %v162, 112
    %v918 = vpop.permute.xlu0 %917
    %919 = vrot.lane.b32.xlu0 %v162, 80
    %v920 = vpop.permute.xlu0 %919
    %v921 = vsel %vm170, %v918, 0
    %v923 = vsel %vm170, %v920, 0
    %925 = vmatprep.subr.mxu0 0.0
    %926 = vmatpush1.xpose.msra.mxu0 %v923
    %927 = vmatprep.subr.mxu0 0.0
    %928 = vmatpush1.xpose.msra.mxu0 0.0
    %929 = vmatprep.subr.mxu0 0.0
    %930 = vmatpush1.xpose.msra.mxu0 0.0
    %931 = vmatprep.subr.mxu0 0.0
    %932 = vmatpush1.xpose.msra.mxu0 0.0
    %933 = vmatprep.subr.mxu0 0.0
    %934 = vmatpush1.xpose.msra.mxu0 0.0
    %935 = vmatprep.subr.mxu0 0.0
    %936 = vmatpush1.xpose.msra.mxu0 0.0
    %937 = vmatprep.subr.mxu0 0.0
    %938 = vmatpush1.xpose.msra.mxu0 0.0
    %939 = vmatprep.subr.mxu0 0.0
    %940 = vmatpush1.xpose.msra.mxu0 0.0
    %941 = vmatprep.subr.mxu0 0.0
    %942 = vmatpush1.xpose.msra.mxu0 0.0
    %943 = vmatprep.subr.mxu0 0.0
    %944 = vmatpush1.xpose.msra.mxu0 0.0
    %945 = vmatprep.subr.mxu0 0.0
    %946 = vmatpush1.xpose.msra.mxu0 0.0
    %947 = vmatprep.subr.mxu0 0.0
    %948 = vmatpush1.xpose.msra.mxu0 0.0
    %949 = vmatprep.subr.mxu0 0.0
    %950 = vmatpush1.xpose.msra.mxu0 0.0
    %951 = vmatprep.subr.mxu0 0.0
    %952 = vmatpush1.xpose.msra.mxu0 0.0
    %953 = vmatprep.subr.mxu0 0.0
    %954 = vmatpush1.xpose.msra.mxu0 0.0
    %955 = vmatprep.subr.mxu0 0.0
    %956 = vmatpush1.xpose.msra.mxu0 0.0
    %957 = vmatprep.subr.mxu0 0.0
    %958 = vmatpush1.xpose.msra.mxu0 0.0
    %959 = vmatprep.subr.mxu0 0.0
    %960 = vmatpush1.xpose.msra.mxu0 0.0
    %961 = vmatprep.subr.mxu0 0.0
    %962 = vmatpush1.xpose.msra.mxu0 0.0
    %963 = vmatprep.subr.mxu0 0.0
    %964 = vmatpush1.xpose.msra.mxu0 0.0
    %965 = vmatprep.subr.mxu0 0.0
    %966 = vmatpush1.xpose.msra.mxu0 0.0
    %967 = vmatprep.subr.mxu0 0.0
    %968 = vmatpush1.xpose.msra.mxu0 0.0
    %969 = vmatprep.subr.mxu0 0.0
    %970 = vmatpush1.xpose.msra.mxu0 0.0
    %971 = vmatprep.subr.mxu0 0.0
    %972 = vmatpush1.xpose.msra.mxu0 0.0
    %973 = vmatprep.subr.mxu0 0.0
    %974 = vmatpush1.xpose.msra.mxu0 0.0
    %975 = vmatprep.subr.mxu0 0.0
    %976 = vmatpush1.xpose.msra.mxu0 0.0
    %977 = vmatprep.subr.mxu0 0.0
    %978 = vmatpush1.xpose.msra.mxu0 0.0
    %979 = vmatprep.subr.mxu0 0.0
    %980 = vmatpush1.xpose.msra.mxu0 0.0
    %981 = vmatprep.subr.mxu0 0.0
    %982 = vmatpush1.xpose.msra.mxu0 0.0
    %983 = vmatprep.subr.mxu0 0.0
    %984 = vmatpush1.xpose.msra.mxu0 0.0
    %985 = vmatprep.subr.mxu0 0.0
    %986 = vmatpush1.xpose.msra.mxu0 0.0
    %987 = vmatprep.subr.mxu0 0.0
    %988 = vmatpush1.xpose.msra.mxu0 0.0
    %989 = vmatprep.mubr.f32.mxu0 0.0
    %990 = vmatmul.mubr.f32.gmra.mrb[0].mxu0 %v921
    %v991 = vpop.f32.mrb[0].mxu0
    %v992 = vadd.f32 0.0, %v991
    %v993 = vpop.f32.mrb[0].mxu0
    %994 = vdwg.mxu0
    %v995 = vmul.f32 %v914, 0.35355338
    %v996 = vmul.f32 %v992, 0.35355338
    %v997 = vadd.f32 %v995, %v165
    %v998 = vadd.f32 %v996, %v166
    %v999 = vsel %vm170, %v997, -inf
    %1000 = vmax.xlane.f32.xlu0 %v999
    %v1001 = vpop.xlane.xlu0 %1000
    %v1002 = vsel %vm170, %v998, -inf
    %1003 = vmax.xlane.f32.xlu0 %v1002
    %v1004 = vpop.xlane.xlu0 %1003
    %v1005 = vsub.f32 %v997, %v1001
    %v1006 = vsub.f32 %v998, %v1004
    %v1007 = vmul.f32 %v1005, 1.442695
    %v1008 = vpow.pop %v1007
    %v1009 = vmul.f32 %v1006, 1.442695
    %v1010 = vpow.pop %v1009
    %v1011 = vsel %vm170, %v1008, 0.0
    %1012 = vadd.xlane.f32.xlu0 %v1011
    %v1013 = vpop.xlane.xlu0 %1012
    %v1014 = vsel %vm170, %v1010, 0.0
    %1015 = vadd.xlane.f32.xlu0 %v1014
    %v1016 = vpop.xlane.xlu0 %1015
    %v1017 = vrcp.pop %v1013
    %v1018 = vrcp.pop %v1016
    %v1019 = vmul.f32 %v1008, %v1017
    %v1020 = vmul.f32 %v1010, %v1018
    %s1021 = scalar_lea.vmem [#allocation8], 16
    %1022 = vst.msk [vmem:[%s1021] sm:$0xff] %vm170, %v1019
    %1023 = vst.msk [vmem:[%s1021 + $0x20] sm:$0xff] %vm170, %v1020
    %1024 = vrot.lane.b32.xlu0 %v157, 48
    %v1025 = vpop.permute.xlu0 %1024
    %v1028 = vsel %vm170, %v1019, 0
    %1030 = vmatprep.subr.mxu0 0.0
    %1031 = vmatpush1.msra.mxu0 %v1025
    %1032 = vmatprep.subr.mxu0 0.0
    %1033 = vmatpush1.msra.mxu0 0.0
    %1034 = vmatprep.subr.mxu0 0.0
    %1035 = vmatpush1.msra.mxu0 0.0
    %1036 = vmatprep.subr.mxu0 0.0
    %1037 = vmatpush1.msra.mxu0 0.0
    %1038 = vmatprep.subr.mxu0 0.0
    %1039 = vmatpush1.msra.mxu0 0.0
    %1040 = vmatprep.subr.mxu0 0.0
    %1041 = vmatpush1.msra.mxu0 0.0
    %1042 = vmatprep.subr.mxu0 0.0
    %1043 = vmatpush1.msra.mxu0 0.0
    %1044 = vmatprep.subr.mxu0 0.0
    %1045 = vmatpush1.msra.mxu0 0.0
    %1046 = vmatprep.subr.mxu0 0.0
    %1047 = vmatpush1.msra.mxu0 0.0
    %1048 = vmatprep.subr.mxu0 0.0
    %1049 = vmatpush1.msra.mxu0 0.0
    %1050 = vmatprep.subr.mxu0 0.0
    %1051 = vmatpush1.msra.mxu0 0.0
    %1052 = vmatprep.subr.mxu0 0.0
    %1053 = vmatpush1.msra.mxu0 0.0
    %1054 = vmatprep.subr.mxu0 0.0
    %1055 = vmatpush1.msra.mxu0 0.0
    %1056 = vmatprep.subr.mxu0 0.0
    %1057 = vmatpush1.msra.mxu0 0.0
    %1058 = vmatprep.subr.mxu0 0.0
    %1059 = vmatpush1.msra.mxu0 0.0
    %1060 = vmatprep.subr.mxu0 0.0
    %1061 = vmatpush1.msra.mxu0 0.0
    %1062 = vmatprep.subr.mxu0 0.0
    %1063 = vmatpush1.msra.mxu0 0.0
    %1064 = vmatprep.subr.mxu0 0.0
    %1065 = vmatpush1.msra.mxu0 0.0
    %1066 = vmatprep.subr.mxu0 0.0
    %1067 = vmatpush1.msra.mxu0 0.0
    %1068 = vmatprep.subr.mxu0 0.0
    %1069 = vmatpush1.msra.mxu0 0.0
    %1070 = vmatprep.subr.mxu0 0.0
    %1071 = vmatpush1.msra.mxu0 0.0
    %1072 = vmatprep.subr.mxu0 0.0
    %1073 = vmatpush1.msra.mxu0 0.0
    %1074 = vmatprep.subr.mxu0 0.0
    %1075 = vmatpush1.msra.mxu0 0.0
    %1076 = vmatprep.subr.mxu0 0.0
    %1077 = vmatpush1.msra.mxu0 0.0
    %1078 = vmatprep.subr.mxu0 0.0
    %1079 = vmatpush1.msra.mxu0 0.0
    %1080 = vmatprep.subr.mxu0 0.0
    %1081 = vmatpush1.msra.mxu0 0.0
    %1082 = vmatprep.subr.mxu0 0.0
    %1083 = vmatpush1.msra.mxu0 0.0
    %1084 = vmatprep.subr.mxu0 0.0
    %1085 = vmatpush1.msra.mxu0 0.0
    %1086 = vmatprep.subr.mxu0 0.0
    %1087 = vmatpush1.msra.mxu0 0.0
    %1088 = vmatprep.subr.mxu0 0.0
    %1089 = vmatpush1.msra.mxu0 0.0
    %1090 = vmatprep.subr.mxu0 0.0
    %1091 = vmatpush1.msra.mxu0 0.0
    %1092 = vmatprep.subr.mxu0 0.0
    %1093 = vmatpush1.msra.mxu0 0.0
    %1094 = vmatprep.mubr.f32.mxu0 0.0
    %1095 = vmatmul.mubr.f32.gmra.mrb[0].mxu0 %v1028
    %v1096 = vpop.f32.mrb[0].mxu0
    %v1097 = vadd.f32 0.0, %v1096
    %v1098 = vpop.f32.mrb[0].mxu0
    %1099 = vdwg.mxu0
    %1100 = vrot.lane.b32.xlu0 %v162, 48
    %v1101 = vpop.permute.xlu0 %1100
    %v1104 = vsel %vm170, %v1020, 0
    %1106 = vmatprep.subr.mxu0 0.0
    %1107 = vmatpush1.msra.mxu0 %v1101
    %1108 = vmatprep.subr.mxu0 0.0
    %1109 = vmatpush1.msra.mxu0 0.0
    %1110 = vmatprep.subr.mxu0 0.0
    %1111 = vmatpush1.msra.mxu0 0.0
    %1112 = vmatprep.subr.mxu0 0.0
    %1113 = vmatpush1.msra.mxu0 0.0
    %1114 = vmatprep.subr.mxu0 0.0
    %1115 = vmatpush1.msra.mxu0 0.0
    %1116 = vmatprep.subr.mxu0 0.0
    %1117 = vmatpush1.msra.mxu0 0.0
    %1118 = vmatprep.subr.mxu0 0.0
    %1119 = vmatpush1.msra.mxu0 0.0
    %1120 = vmatprep.subr.mxu0 0.0
    %1121 = vmatpush1.msra.mxu0 0.0
    %1122 = vmatprep.subr.mxu0 0.0
    %1123 = vmatpush1.msra.mxu0 0.0
    %1124 = vmatprep.subr.mxu0 0.0
    %1125 = vmatpush1.msra.mxu0 0.0
    %1126 = vmatprep.subr.mxu0 0.0
    %1127 = vmatpush1.msra.mxu0 0.0
    %1128 = vmatprep.subr.mxu0 0.0
    %1129 = vmatpush1.msra.mxu0 0.0
    %1130 = vmatprep.subr.mxu0 0.0
    %1131 = vmatpush1.msra.mxu0 0.0
    %1132 = vmatprep.subr.mxu0 0.0
    %1133 = vmatpush1.msra.mxu0 0.0
    %1134 = vmatprep.subr.mxu0 0.0
    %1135 = vmatpush1.msra.mxu0 0.0
    %1136 = vmatprep.subr.mxu0 0.0
    %1137 = vmatpush1.msra.mxu0 0.0
    %1138 = vmatprep.subr.mxu0 0.0
    %1139 = vmatpush1.msra.mxu0 0.0
    %1140 = vmatprep.subr.mxu0 0.0
    %1141 = vmatpush1.msra.mxu0 0.0
    %1142 = vmatprep.subr.mxu0 0.0
    %1143 = vmatpush1.msra.mxu0 0.0
    %1144 = vmatprep.subr.mxu0 0.0
    %1145 = vmatpush1.msra.mxu0 0.0
    %1146 = vmatprep.subr.mxu0 0.0
    %1147 = vmatpush1.msra.mxu0 0.0
    %1148 = vmatprep.subr.mxu0 0.0
    %1149 = vmatpush1.msra.mxu0 0.0
    %1150 = vmatprep.subr.mxu0 0.0
    %1151 = vmatpush1.msra.mxu0 0.0
    %1152 = vmatprep.subr.mxu0 0.0
    %1153 = vmatpush1.msra.mxu0 0.0
    %1154 = vmatprep.subr.mxu0 0.0
    %1155 = vmatpush1.msra.mxu0 0.0
    %1156 = vmatprep.subr.mxu0 0.0
    %1157 = vmatpush1.msra.mxu0 0.0
    %1158 = vmatprep.subr.mxu0 0.0
    %1159 = vmatpush1.msra.mxu0 0.0
    %1160 = vmatprep.subr.mxu0 0.0
    %1161 = vmatpush1.msra.mxu0 0.0
    %1162 = vmatprep.subr.mxu0 0.0
    %1163 = vmatpush1.msra.mxu0 0.0
    %1164 = vmatprep.subr.mxu0 0.0
    %1165 = vmatpush1.msra.mxu0 0.0
    %1166 = vmatprep.subr.mxu0 0.0
    %1167 = vmatpush1.msra.mxu0 0.0
    %1168 = vmatprep.subr.mxu0 0.0
    %1169 = vmatpush1.msra.mxu0 0.0
    %1170 = vmatprep.mubr.f32.mxu0 0.0
    %1171 = vmatmul.mubr.f32.gmra.mrb[0].mxu0 %v1104
    %v1172 = vpop.f32.mrb[0].mxu0
    %v1173 = vadd.f32 0.0, %v1172
    %v1174 = vpop.f32.mrb[0].mxu0
    %1175 = vdwg.mxu0
    %1176 = vrot.lane.b32.xlu0 %v157, 104
    %v1177 = vpop.permute.xlu0 %1176
    %1178 = vrot.lane.b32.xlu0 %v157, 72
    %v1179 = vpop.permute.xlu0 %1178
    %v1180 = vsel %vm170, %v1177, 0
    %v1182 = vsel %vm170, %v1179, 0
    %1184 = vmatprep.subr.mxu0 0.0
    %1185 = vmatpush1.xpose.msra.mxu0 %v1182
    %1186 = vmatprep.subr.mxu0 0.0
    %1187 = vmatpush1.xpose.msra.mxu0 0.0
    %1188 = vmatprep.subr.mxu0 0.0
    %1189 = vmatpush1.xpose.msra.mxu0 0.0
    %1190 = vmatprep.subr.mxu0 0.0
    %1191 = vmatpush1.xpose.msra.mxu0 0.0
    %1192 = vmatprep.subr.mxu0 0.0
    %1193 = vmatpush1.xpose.msra.mxu0 0.0
    %1194 = vmatprep.subr.mxu0 0.0
    %1195 = vmatpush1.xpose.msra.mxu0 0.0
    %1196 = vmatprep.subr.mxu0 0.0
    %1197 = vmatpush1.xpose.msra.mxu0 0.0
    %1198 = vmatprep.subr.mxu0 0.0
    %1199 = vmatpush1.xpose.msra.mxu0 0.0
    %1200 = vmatprep.subr.mxu0 0.0
    %1201 = vmatpush1.xpose.msra.mxu0 0.0
    %1202 = vmatprep.subr.mxu0 0.0
    %1203 = vmatpush1.xpose.msra.mxu0 0.0
    %1204 = vmatprep.subr.mxu0 0.0
    %1205 = vmatpush1.xpose.msra.mxu0 0.0
    %1206 = vmatprep.subr.mxu0 0.0
    %1207 = vmatpush1.xpose.msra.mxu0 0.0
    %1208 = vmatprep.subr.mxu0 0.0
    %1209 = vmatpush1.xpose.msra.mxu0 0.0
    %1210 = vmatprep.subr.mxu0 0.0
    %1211 = vmatpush1.xpose.msra.mxu0 0.0
    %1212 = vmatprep.subr.mxu0 0.0
    %1213 = vmatpush1.xpose.msra.mxu0 0.0
    %1214 = vmatprep.subr.mxu0 0.0
    %1215 = vmatpush1.xpose.msra.mxu0 0.0
    %1216 = vmatprep.subr.mxu0 0.0
    %1217 = vmatpush1.xpose.msra.mxu0 0.0
    %1218 = vmatprep.subr.mxu0 0.0
    %1219 = vmatpush1.xpose.msra.mxu0 0.0
    %1220 = vmatprep.subr.mxu0 0.0
    %1221 = vmatpush1.xpose.msra.mxu0 0.0
    %1222 = vmatprep.subr.mxu0 0.0
    %1223 = vmatpush1.xpose.msra.mxu0 0.0
    %1224 = vmatprep.subr.mxu0 0.0
    %1225 = vmatpush1.xpose.msra.mxu0 0.0
    %1226 = vmatprep.subr.mxu0 0.0
    %1227 = vmatpush1.xpose.msra.mxu0 0.0
    %1228 = vmatprep.subr.mxu0 0.0
    %1229 = vmatpush1.xpose.msra.mxu0 0.0
    %1230 = vmatprep.subr.mxu0 0.0
    %1231 = vmatpush1.xpose.msra.mxu0 0.0
    %1232 = vmatprep.subr.mxu0 0.0
    %1233 = vmatpush1.xpose.msra.mxu0 0.0
    %1234 = vmatprep.subr.mxu0 0.0
    %1235 = vmatpush1.xpose.msra.mxu0 0.0
    %1236 = vmatprep.subr.mxu0 0.0
    %1237 = vmatpush1.xpose.msra.mxu0 0.0
    %1238 = vmatprep.subr.mxu0 0.0
    %1239 = vmatpush1.xpose.msra.mxu0 0.0
    %1240 = vmatprep.subr.mxu0 0.0
    %1241 = vmatpush1.xpose.msra.mxu0 0.0
    %1242 = vmatprep.subr.mxu0 0.0
    %1243 = vmatpush1.xpose.msra.mxu0 0.0
    %1244 = vmatprep.subr.mxu0 0.0
    %1245 = vmatpush1.xpose.msra.mxu0 0.0
    %1246 = vmatprep.subr.mxu0 0.0
    %1247 = vmatpush1.xpose.msra.mxu0 0.0
    %1248 = vmatprep.mubr.f32.mxu0 0.0
    %1249 = vmatmul.mubr.f32.gmra.mrb[0].mxu0 %v1180
    %v1250 = vpop.f32.mrb[0].mxu0
    %v1251 = vadd.f32 0.0, %v1250
    %v1252 = vpop.f32.mrb[0].mxu0
    %1253 = vdwg.mxu0
    %1254 = vrot.lane.b32.xlu0 %v162, 104
    %v1255 = vpop.permute.xlu0 %1254
    %1256 = vrot.lane.b32.xlu0 %v162, 72
    %v1257 = vpop.permute.xlu0 %1256
    %v1258 = vsel %vm170, %v1255, 0
    %v1260 = vsel %vm170, %v1257, 0
    %1262 = vmatprep.subr.mxu0 0.0
    %1263 = vmatpush1.xpose.msra.mxu0 %v1260
    %1264 = vmatprep.subr.mxu0 0.0
    %1265 = vmatpush1.xpose.msra.mxu0 0.0
    %1266 = vmatprep.subr.mxu0 0.0
    %1267 = vmatpush1.xpose.msra.mxu0 0.0
    %1268 = vmatprep.subr.mxu0 0.0
    %1269 = vmatpush1.xpose.msra.mxu0 0.0
    %1270 = vmatprep.subr.mxu0 0.0
    %1271 = vmatpush1.xpose.msra.mxu0 0.0
    %1272 = vmatprep.subr.mxu0 0.0
    %1273 = vmatpush1.xpose.msra.mxu0 0.0
    %1274 = vmatprep.subr.mxu0 0.0
    %1275 = vmatpush1.xpose.msra.mxu0 0.0
    %1276 = vmatprep.subr.mxu0 0.0
    %1277 = vmatpush1.xpose.msra.mxu0 0.0
    %1278 = vmatprep.subr.mxu0 0.0
    %1279 = vmatpush1.xpose.msra.mxu0 0.0
    %1280 = vmatprep.subr.mxu0 0.0
    %1281 = vmatpush1.xpose.msra.mxu0 0.0
    %1282 = vmatprep.subr.mxu0 0.0
    %1283 = vmatpush1.xpose.msra.mxu0 0.0
    %1284 = vmatprep.subr.mxu0 0.0
    %1285 = vmatpush1.xpose.msra.mxu0 0.0
    %1286 = vmatprep.subr.mxu0 0.0
    %1287 = vmatpush1.xpose.msra.mxu0 0.0
    %1288 = vmatprep.subr.mxu0 0.0
    %1289 = vmatpush1.xpose.msra.mxu0 0.0
    %1290 = vmatprep.subr.mxu0 0.0
    %1291 = vmatpush1.xpose.msra.mxu0 0.0
    %1292 = vmatprep.subr.mxu0 0.0
    %1293 = vmatpush1.xpose.msra.mxu0 0.0
    %1294 = vmatprep.subr.mxu0 0.0
    %1295 = vmatpush1.xpose.msra.mxu0 0.0
    %1296 = vmatprep.subr.mxu0 0.0
    %1297 = vmatpush1.xpose.msra.mxu0 0.0
    %1298 = vmatprep.subr.mxu0 0.0
    %1299 = vmatpush1.xpose.msra.mxu0 0.0
    %1300 = vmatprep.subr.mxu0 0.0
    %1301 = vmatpush1.xpose.msra.mxu0 0.0
    %1302 = vmatprep.subr.mxu0 0.0
    %1303 = vmatpush1.xpose.msra.mxu0 0.0
    %1304 = vmatprep.subr.mxu0 0.0
    %1305 = vmatpush1.xpose.msra.mxu0 0.0
    %1306 = vmatprep.subr.mxu0 0.0
    %1307 = vmatpush1.xpose.msra.mxu0 0.0
    %1308 = vmatprep.subr.mxu0 0.0
    %1309 = vmatpush1.xpose.msra.mxu0 0.0
    %1310 = vmatprep.subr.mxu0 0.0
    %1311 = vmatpush1.xpose.msra.mxu0 0.0
    %1312 = vmatprep.subr.mxu0 0.0
    %1313 = vmatpush1.xpose.msra.mxu0 0.0
    %1314 = vmatprep.subr.mxu0 0.0
    %1315 = vmatpush1.xpose.msra.mxu0 0.0
    %1316 = vmatprep.subr.mxu0 0.0
    %1317 = vmatpush1.xpose.msra.mxu0 0.0
    %1318 = vmatprep.subr.mxu0 0.0
    %1319 = vmatpush1.xpose.msra.mxu0 0.0
    %1320 = vmatprep.subr.mxu0 0.0
    %1321 = vmatpush1.xpose.msra.mxu0 0.0
    %1322 = vmatprep.subr.mxu0 0.0
    %1323 = vmatpush1.xpose.msra.mxu0 0.0
    %1324 = vmatprep.subr.mxu0 0.0
    %1325 = vmatpush1.xpose.msra.mxu0 0.0
    %1326 = vmatprep.mubr.f32.mxu0 0.0
    %1327 = vmatmul.mubr.f32.gmra.mrb[0].mxu0 %v1258
    %v1328 = vpop.f32.mrb[0].mxu0
    %v1329 = vadd.f32 0.0, %v1328
    %v1330 = vpop.f32.mrb[0].mxu0
    %1331 = vdwg.mxu0
    %v1332 = vmul.f32 %v1251, 0.35355338
    %v1333 = vmul.f32 %v1329, 0.35355338
    %v1334 = vadd.f32 %v1332, %v165
    %v1335 = vadd.f32 %v1333, %v166
    %v1336 = vsel %vm170, %v1334, -inf
    %1337 = vmax.xlane.f32.xlu0 %v1336
    %v1338 = vpop.xlane.xlu0 %1337
    %v1339 = vsel %vm170, %v1335, -inf
    %1340 = vmax.xlane.f32.xlu0 %v1339
    %v1341 = vpop.xlane.xlu0 %1340
    %v1342 = vsub.f32 %v1334, %v1338
    %v1343 = vsub.f32 %v1335, %v1341
    %v1344 = vmul.f32 %v1342, 1.442695
    %v1345 = vpow.pop %v1344
    %v1346 = vmul.f32 %v1343, 1.442695
    %v1347 = vpow.pop %v1346
    %v1348 = vsel %vm170, %v1345, 0.0
    %1349 = vadd.xlane.f32.xlu0 %v1348
    %v1350 = vpop.xlane.xlu0 %1349
    %v1351 = vsel %vm170, %v1347, 0.0
    %1352 = vadd.xlane.f32.xlu0 %v1351
    %v1353 = vpop.xlane.xlu0 %1352
    %v1354 = vrcp.pop %v1350
    %v1355 = vrcp.pop %v1353
    %v1356 = vmul.f32 %v1345, %v1354
    %v1357 = vmul.f32 %v1347, %v1355
    %s1358 = scalar_lea.vmem [#allocation8], 24
    %1359 = vst.msk [vmem:[%s1358] sm:$0xff] %vm170, %v1356
    %1360 = vst.msk [vmem:[%s1358 + $0x20] sm:$0xff] %vm170, %v1357
    %1361 = vrot.lane.b32.xlu0 %v157, 40
    %v1362 = vpop.permute.xlu0 %1361
    %v1365 = vsel %vm170, %v1356, 0
    %1367 = vmatprep.subr.mxu0 0.0
    %1368 = vmatpush1.msra.mxu0 %v1362
    %1369 = vmatprep.subr.mxu0 0.0
    %1370 = vmatpush1.msra.mxu0 0.0
    %1371 = vmatprep.subr.mxu0 0.0
    %1372 = vmatpush1.msra.mxu0 0.0
    %1373 = vmatprep.subr.mxu0 0.0
    %1374 = vmatpush1.msra.mxu0 0.0
    %1375 = vmatprep.subr.mxu0 0.0
    %1376 = vmatpush1.msra.mxu0 0.0
    %1377 = vmatprep.subr.mxu0 0.0
    %1378 = vmatpush1.msra.mxu0 0.0
    %1379 = vmatprep.subr.mxu0 0.0
    %1380 = vmatpush1.msra.mxu0 0.0
    %1381 = vmatprep.subr.mxu0 0.0
    %1382 = vmatpush1.msra.mxu0 0.0
    %1383 = vmatprep.subr.mxu0 0.0
    %1384 = vmatpush1.msra.mxu0 0.0
    %1385 = vmatprep.subr.mxu0 0.0
    %1386 = vmatpush1.msra.mxu0 0.0
    %1387 = vmatprep.subr.mxu0 0.0
    %1388 = vmatpush1.msra.mxu0 0.0
    %1389 = vmatprep.subr.mxu0 0.0
    %1390 = vmatpush1.msra.mxu0 0.0
    %1391 = vmatprep.subr.mxu0 0.0
    %1392 = vmatpush1.msra.mxu0 0.0
    %1393 = vmatprep.subr.mxu0 0.0
    %1394 = vmatpush1.msra.mxu0 0.0
    %1395 = vmatprep.subr.mxu0 0.0
    %1396 = vmatpush1.msra.mxu0 0.0
    %1397 = vmatprep.subr.mxu0 0.0
    %1398 = vmatpush1.msra.mxu0 0.0
    %1399 = vmatprep.subr.mxu0 0.0
    %1400 = vmatpush1.msra.mxu0 0.0
    %1401 = vmatprep.subr.mxu0 0.0
    %1402 = vmatpush1.msra.mxu0 0.0
    %1403 = vmatprep.subr.mxu0 0.0
    %1404 = vmatpush1.msra.mxu0 0.0
    %1405 = vmatprep.subr.mxu0 0.0
    %1406 = vmatpush1.msra.mxu0 0.0
    %1407 = vmatprep.subr.mxu0 0.0
    %1408 = vmatpush1.msra.mxu0 0.0
    %1409 = vmatprep.subr.mxu0 0.0
    %1410 = vmatpush1.msra.mxu0 0.0
    %1411 = vmatprep.subr.mxu0 0.0
    %1412 = vmatpush1.msra.mxu0 0.0
    %1413 = vmatprep.subr.mxu0 0.0
    %1414 = vmatpush1.msra.mxu0 0.0
    %1415 = vmatprep.subr.mxu0 0.0
    %1416 = vmatpush1.msra.mxu0 0.0
    %1417 = vmatprep.subr.mxu0 0.0
    %1418 = vmatpush1.msra.mxu0 0.0
    %1419 = vmatprep.subr.mxu0 0.0
    %1420 = vmatpush1.msra.mxu0 0.0
    %1421 = vmatprep.subr.mxu0 0.0
    %1422 = vmatpush1.msra.mxu0 0.0
    %1423 = vmatprep.subr.mxu0 0.0
    %1424 = vmatpush1.msra.mxu0 0.0
    %1425 = vmatprep.subr.mxu0 0.0
    %1426 = vmatpush1.msra.mxu0 0.0
    %1427 = vmatprep.subr.mxu0 0.0
    %1428 = vmatpush1.msra.mxu0 0.0
    %1429 = vmatprep.subr.mxu0 0.0
    %1430 = vmatpush1.msra.mxu0 0.0
    %1431 = vmatprep.mubr.f32.mxu0 0.0
    %1432 = vmatmul.mubr.f32.gmra.mrb[0].mxu0 %v1365
    %v1433 = vpop.f32.mrb[0].mxu0
    %v1434 = vadd.f32 0.0, %v1433
    %v1435 = vpop.f32.mrb[0].mxu0
    %1436 = vdwg.mxu0
    %1437 = vrot.lane.b32.xlu0 %v162, 40
    %v1438 = vpop.permute.xlu0 %1437
    %v1441 = vsel %vm170, %v1357, 0
    %1443 = vmatprep.subr.mxu0 0.0
    %1444 = vmatpush1.msra.mxu0 %v1438
    %1445 = vmatprep.subr.mxu0 0.0
    %1446 = vmatpush1.msra.mxu0 0.0
    %1447 = vmatprep.subr.mxu0 0.0
    %1448 = vmatpush1.msra.mxu0 0.0
    %1449 = vmatprep.subr.mxu0 0.0
    %1450 = vmatpush1.msra.mxu0 0.0
    %1451 = vmatprep.subr.mxu0 0.0
    %1452 = vmatpush1.msra.mxu0 0.0
    %1453 = vmatprep.subr.mxu0 0.0
    %1454 = vmatpush1.msra.mxu0 0.0
    %1455 = vmatprep.subr.mxu0 0.0
    %1456 = vmatpush1.msra.mxu0 0.0
    %1457 = vmatprep.subr.mxu0 0.0
    %1458 = vmatpush1.msra.mxu0 0.0
    %1459 = vmatprep.subr.mxu0 0.0
    %1460 = vmatpush1.msra.mxu0 0.0
    %1461 = vmatprep.subr.mxu0 0.0
    %1462 = vmatpush1.msra.mxu0 0.0
    %1463 = vmatprep.subr.mxu0 0.0
    %1464 = vmatpush1.msra.mxu0 0.0
    %1465 = vmatprep.subr.mxu0 0.0
    %1466 = vmatpush1.msra.mxu0 0.0
    %1467 = vmatprep.subr.mxu0 0.0
    %1468 = vmatpush1.msra.mxu0 0.0
    %1469 = vmatprep.subr.mxu0 0.0
    %1470 = vmatpush1.msra.mxu0 0.0
    %1471 = vmatprep.subr.mxu0 0.0
    %1472 = vmatpush1.msra.mxu0 0.0
    %1473 = vmatprep.subr.mxu0 0.0
    %1474 = vmatpush1.msra.mxu0 0.0
    %1475 = vmatprep.subr.mxu0 0.0
    %1476 = vmatpush1.msra.mxu0 0.0
    %1477 = vmatprep.subr.mxu0 0.0
    %1478 = vmatpush1.msra.mxu0 0.0
    %1479 = vmatprep.subr.mxu0 0.0
    %1480 = vmatpush1.msra.mxu0 0.0
    %1481 = vmatprep.subr.mxu0 0.0
    %1482 = vmatpush1.msra.mxu0 0.0
    %1483 = vmatprep.subr.mxu0 0.0
    %1484 = vmatpush1.msra.mxu0 0.0
    %1485 = vmatprep.subr.mxu0 0.0
    %1486 = vmatpush1.msra.mxu0 0.0
    %1487 = vmatprep.subr.mxu0 0.0
    %1488 = vmatpush1.msra.mxu0 0.0
    %1489 = vmatprep.subr.mxu0 0.0
    %1490 = vmatpush1.msra.mxu0 0.0
    %1491 = vmatprep.subr.mxu0 0.0
    %1492 = vmatpush1.msra.mxu0 0.0
    %1493 = vmatprep.subr.mxu0 0.0
    %1494 = vmatpush1.msra.mxu0 0.0
    %1495 = vmatprep.subr.mxu0 0.0
    %1496 = vmatpush1.msra.mxu0 0.0
    %1497 = vmatprep.subr.mxu0 0.0
    %1498 = vmatpush1.msra.mxu0 0.0
    %1499 = vmatprep.subr.mxu0 0.0
    %1500 = vmatpush1.msra.mxu0 0.0
    %1501 = vmatprep.subr.mxu0 0.0
    %1502 = vmatpush1.msra.mxu0 0.0
    %1503 = vmatprep.subr.mxu0 0.0
    %1504 = vmatpush1.msra.mxu0 0.0
    %1505 = vmatprep.subr.mxu0 0.0
    %1506 = vmatpush1.msra.mxu0 0.0
    %1507 = vmatprep.mubr.f32.mxu0 0.0
    %1508 = vmatmul.mubr.f32.gmra.mrb[0].mxu0 %v1441
    %v1509 = vpop.f32.mrb[0].mxu0
    %v1510 = vadd.f32 0.0, %v1509
    %v1511 = vpop.f32.mrb[0].mxu0
    %1512 = vdwg.mxu0
    %1515 = vrot.lane.b32.xlu0 %v760, 8
    %v1516 = vpop.permute.xlu0 %1515
    %1517 = vrot.lane.b32.xlu0 %v836, 8
    %v1518 = vpop.permute.xlu0 %1517
    %1523 = vrot.lane.b32.xlu0 %v1097, 16
    %v1524 = vpop.permute.xlu0 %1523
    %1525 = vrot.lane.b32.xlu0 %v1173, 16
    %v1526 = vpop.permute.xlu0 %1525
    %1531 = vrot.lane.b32.xlu0 %v1434, 24
    %v1532 = vpop.permute.xlu0 %1531
    %1533 = vrot.lane.b32.xlu0 %v1510, 24
    %v1534 = vpop.permute.xlu0 %1533
    %v1537 = vsel %vm170, %v423, %v1516
    %v1538 = vsel %vm170, %v499, %v1518
    %vm1539 = vcmask 130048
    %v1540 = vsel %vm1539, %v1537, %v1524
    %v1541 = vsel %vm1539, %v1538, %v1526
    %vm1542 = vcmask 195584
    %v1543 = vsel %vm1542, %v1540, %v1532
    %v1544 = vsel %vm1542, %v1541, %v1534
    %v1545 = vld [vmem:[%s4] sm:$0xff]
    %v1546 = vld [vmem:[%s4 + $0x8] sm:$0xff]
    %v1547 = vld [vmem:[%s4 + $0x10] sm:$0xff]
    %v1548 = vld [vmem:[%s4 + $0x18] sm:$0xff]
    %v1549 = vlaneseq
    %v1550 = vshrl.u32 %v1549, 7
    %v1551 = vsub.s32 0, %v1550
    %v1552 = vrot.slane %v66, %v1551
    %v1554 = vsel %vm83, %v1543, 0
    %v1557 = vsel %vm83, %v1544, 0
    %1559 = vmatprep.subr.mxu0 0.0
    %1560 = vmatpush1.msra.mxu0 %v1545
    %1561 = vmatprep.subr.mxu0 0.0
    %1562 = vmatpush1.msra.mxu0 %v1546
    %1563 = vmatprep.subr.mxu0 0.0
    %1564 = vmatpush1.msra.mxu0 %v1547
    %1565 = vmatprep.subr.mxu0 0.0
    %1566 = vmatpush1.msra.mxu0 %v1548
    %1567 = vmatprep.subr.mxu0 0.0
    %1568 = vmatpush1.msra.mxu0 0.0
    %1569 = vmatprep.subr.mxu0 0.0
    %1570 = vmatpush1.msra.mxu0 0.0
    %1571 = vmatprep.subr.mxu0 0.0
    %1572 = vmatpush1.msra.mxu0 0.0
    %1573 = vmatprep.subr.mxu0 0.0
    %1574 = vmatpush1.msra.mxu0 0.0
    %1575 = vmatprep.subr.mxu0 0.0
    %1576 = vmatpush1.msra.mxu0 0.0
    %1577 = vmatprep.subr.mxu0 0.0
    %1578 = vmatpush1.msra.mxu0 0.0
    %1579 = vmatprep.subr.mxu0 0.0
    %1580 = vmatpush1.msra.mxu0 0.0
    %1581 = vmatprep.subr.mxu0 0.0
    %1582 = vmatpush1.msra.mxu0 0.0
    %1583 = vmatprep.subr.mxu0 0.0
    %1584 = vmatpush1.msra.mxu0 0.0
    %1585 = vmatprep.subr.mxu0 0.0
    %1586 = vmatpush1.msra.mxu0 0.0
    %1587 = vmatprep.subr.mxu0 0.0
    %1588 = vmatpush1.msra.mxu0 0.0
    %1589 = vmatprep.subr.mxu0 0.0
    %1590 = vmatpush1.msra.mxu0 0.0
    %1591 = vmatprep.subr.mxu0 0.0
    %1592 = vmatpush1.msra.mxu0 0.0
    %1593 = vmatprep.subr.mxu0 0.0
    %1594 = vmatpush1.msra.mxu0 0.0
    %1595 = vmatprep.subr.mxu0 0.0
    %1596 = vmatpush1.msra.mxu0 0.0
    %1597 = vmatprep.subr.mxu0 0.0
    %1598 = vmatpush1.msra.mxu0 0.0
    %1599 = vmatprep.subr.mxu0 0.0
    %1600 = vmatpush1.msra.mxu0 0.0
    %1601 = vmatprep.subr.mxu0 0.0
    %1602 = vmatpush1.msra.mxu0 0.0
    %1603 = vmatprep.subr.mxu0 0.0
    %1604 = vmatpush1.msra.mxu0 0.0
    %1605 = vmatprep.subr.mxu0 0.0
    %1606 = vmatpush1.msra.mxu0 0.0
    %1607 = vmatprep.subr.mxu0 0.0
    %1608 = vmatpush1.msra.mxu0 0.0
    %1609 = vmatprep.subr.mxu0 0.0
    %1610 = vmatpush1.msra.mxu0 0.0
    %1611 = vmatprep.subr.mxu0 0.0
    %1612 = vmatpush1.msra.mxu0 0.0
    %1613 = vmatprep.subr.mxu0 0.0
    %1614 = vmatpush1.msra.mxu0 0.0
    %1615 = vmatprep.subr.mxu0 0.0
    %1616 = vmatpush1.msra.mxu0 0.0
    %1617 = vmatprep.subr.mxu0 0.0
    %1618 = vmatpush1.msra.mxu0 0.0
    %1619 = vmatprep.subr.mxu0 0.0
    %1620 = vmatpush1.msra.mxu0 0.0
    %1621 = vmatprep.subr.mxu0 0.0
    %1622 = vmatpush1.msra.mxu0 0.0
    %1623 = vmatprep.mubr.f32.mxu0 0.0
    %1624 = vmatmul.mubr.f32.gmra.mrb[0].mxu0 %v1554
    %v1625 = vpop.f32.mrb[0].mxu0
    %v1626 = vadd.f32 %v1552, %v1625
    %v1627 = vpop.f32.mrb[0].mxu0
    %1628 = vmatprep.mubr.f32.mxu0 0.0
    %1629 = vmatmul.mubr.f32.gmra.mrb[0].mxu0 %v1557
    %v1630 = vpop.f32.mrb[0].mxu0
    %v1631 = vadd.f32 %v1552, %v1630
    %v1632 = vpop.f32.mrb[0].mxu0
    %1633 = vdwg.mxu0
    %v1634 = vadd.f32 %v64, %v1626
    %v1635 = vadd.f32 %v65, %v1631
    %v1636 = vsel %vm83, %v1634, 0.0
    %1637 = vadd.xlane.f32.xlu0 %v1636
    %v1638 = vpop.xlane.xlu0 %1637
    %v1639 = vsel %vm83, %v1635, 0.0
    %1640 = vadd.xlane.f32.xlu0 %v1639
    %v1641 = vpop.xlane.xlu0 %1640
    %v1642 = vrcp.pop 32.0
    %v1643 = vmul.f32 %v1638, %v1642
    %v1644 = vmul.f32 %v1641, %v1642
    %v1645 = vsub.f32 %v1634, %v1643
    %v1646 = vsub.f32 %v1635, %v1644
    %v1647 = vmul.f32 %v1645, %v1645
    %v1648 = vmul.f32 %v1646, %v1646
    %v1649 = vsel %vm83, %v1647, 0.0
    %1650 = vadd.xlane.f32.xlu0 %v1649
    %v1651 = vpop.xlane.xlu0 %1650
    %v1652 = vsel %vm83, %v1648, 0.0
    %1653 = vadd.xlane.f32.xlu0 %v1652
    %v1654 = vpop.xlane.xlu0 %1653
    %v1655 = vmul.f32 %v1651, %v1642
    %v1656 = vmul.f32 %v1654, %v1642
    %v1657 = vadd.f32 %v1655, 1e-05
    %v1658 = vadd.f32 %v1656, 1e-05
    %v1659 = vrsqrt.pop %v1657
    %v1660 = vrsqrt.pop %v1658
    %v1661 = vmul.f32 %v1645, %v1659
    %v1662 = vmul.f32 %v1646, %v1660
    %v1663 = vlaneseq
    %v1664 = vshrl.u32 %v1663, 7
    %v1665 = vsub.s32 0, %v1664
    %v1666 = vrot.slane %v67, %v1665
    %v1667 = vmul.f32 %v1661, %v1666
    %v1668 = vmul.f32 %v1662, %v1666
    %v1669 = vlaneseq
    %v1670 = vshrl.u32 %v1669, 7
    %v1671 = vsub.s32 0, %v1670
    %v1672 = vrot.slane %v68, %v1671
    %v1673 = vadd.f32 %v1667, %v1672
    %v1674 = vadd.f32 %v1668, %v1672
    %v1675 = vld [vmem:[%s5] sm:$0xff]
    %v1676 = vld [vmem:[%s5 + $0x8] sm:$0xff]
    %v1677 = vld [vmem:[%s5 + $0x10] sm:$0xff]
    %v1678 = vld [vmem:[%s5 + $0x18] sm:$0xff]
    %v1679 = vld [vmem:[%s6] sm:$0x1]
    %v1681 = vlaneseq
    %v1682 = vshrl.u32 %v1681, 7
    %v1683 = vsub.s32 0, %v1682
    %v1684 = vrot.slane %v1679, %v1683
    %v1687 = vsel %vm83, %v1673, 0
    %v1690 = vsel %vm83, %v1674, 0
    %1692 = vmatprep.subr.mxu0 0.0
    %1693 = vmatpush1.msra.mxu0 %v1675
    %1694 = vmatprep.subr.mxu0 0.0
    %1695 = vmatpush1.msra.mxu0 %v1676
    %1696 = vmatprep.subr.mxu0 0.0
    %1697 = vmatpush1.msra.mxu0 %v1677
    %1698 = vmatprep.subr.mxu0 0.0
    %1699 = vmatpush1.msra.mxu0 %v1678
    %1700 = vmatprep.subr.mxu0 0.0
    %1701 = vmatpush1.msra.mxu0 0.0
    %1702 = vmatprep.subr.mxu0 0.0
    %1703 = vmatpush1.msra.mxu0 0.0
    %1704 = vmatprep.subr.mxu0 0.0
    %1705 = vmatpush1.msra.mxu0 0.0
    %1706 = vmatprep.subr.mxu0 0.0
    %1707 = vmatpush1.msra.mxu0 0.0
    %1708 = vmatprep.subr.mxu0 0.0
    %1709 = vmatpush1.msra.mxu0 0.0
    %1710 = vmatprep.subr.mxu0 0.0
    %1711 = vmatpush1.msra.mxu0 0.0
    %1712 = vmatprep.subr.mxu0 0.0
    %1713 = vmatpush1.msra.mxu0 0.0
    %1714 = vmatprep.subr.mxu0 0.0
    %1715 = vmatpush1.msra.mxu0 0.0
    %1716 = vmatprep.subr.mxu0 0.0
    %1717 = vmatpush1.msra.mxu0 0.0
    %1718 = vmatprep.subr.mxu0 0.0
    %1719 = vmatpush1.msra.mxu0 0.0
    %1720 = vmatprep.subr.mxu0 0.0
    %1721 = vmatpush1.msra.mxu0 0.0
    %1722 = vmatprep.subr.mxu0 0.0
    %1723 = vmatpush1.msra.mxu0 0.0
    %1724 = vmatprep.subr.mxu0 0.0
    %1725 = vmatpush1.msra.mxu0 0.0
    %1726 = vmatprep.subr.mxu0 0.0
    %1727 = vmatpush1.msra.mxu0 0.0
    %1728 = vmatprep.subr.mxu0 0.0
    %1729 = vmatpush1.msra.mxu0 0.0
    %1730 = vmatprep.subr.mxu0 0.0
    %1731 = vmatpush1.msra.mxu0 0.0
    %1732 = vmatprep.subr.mxu0 0.0
    %1733 = vmatpush1.msra.mxu0 0.0
    %1734 = vmatprep.subr.mxu0 0.0
    %1735 = vmatpush1.msra.mxu0 0.0
    %1736 = vmatprep.subr.mxu0 0.0
    %1737 = vmatpush1.msra.mxu0 0.0
    %1738 = vmatprep.subr.mxu0 0.0
    %1739 = vmatpush1.msra.mxu0 0.0
    %1740 = vmatprep.subr.mxu0 0.0
    %1741 = vmatpush1.msra.mxu0 0.0
    %1742 = vmatprep.subr.mxu0 0.0
    %1743 = vmatpush1.msra.mxu0 0.0
    %1744 = vmatprep.subr.mxu0 0.0
    %1745 = vmatpush1.msra.mxu0 0.0
    %1746 = vmatprep.subr.mxu0 0.0
    %1747 = vmatpush1.msra.mxu0 0.0
    %1748 = vmatprep.subr.mxu0 0.0
    %1749 = vmatpush1.msra.mxu0 0.0
    %1750 = vmatprep.subr.mxu0 0.0
    %1751 = vmatpush1.msra.mxu0 0.0
    %1752 = vmatprep.subr.mxu0 0.0
    %1753 = vmatpush1.msra.mxu0 0.0
    %1754 = vmatprep.subr.mxu0 0.0
    %1755 = vmatpush1.msra.mxu0 0.0
    %1756 = vmatprep.mubr.f32.mxu0 0.0
    %1757 = vmatmul.mubr.f32.gmra.mrb[0].mxu0 %v1687
    %v1758 = vpop.f32.mrb[0].mxu0
    %v1759 = vadd.f32 %v1684, %v1758
    %v1760 = vpop.f32.mrb[0].mxu0
    %1761 = vmatprep.mubr.f32.mxu0 0.0
    %1762 = vmatmul.mubr.f32.gmra.mrb[0].mxu0 %v1690
    %v1763 = vpop.f32.mrb[0].mxu0
    %v1764 = vadd.f32 %v1684, %v1763
    %v1765 = vpop.f32.mrb[0].mxu0
    %1766 = vdwg.mxu0
    %v1767 = vmax.f32 %v1759, 0.0
    %v1768 = vmax.f32 %v1764, 0.0
    %v1769 = vld [vmem:[%s7] sm:$0xff]
    %v1770 = vld [vmem:[%s7 + $0x8] sm:$0xff]
    %v1771 = vld [vmem:[%s7 + $0x10] sm:$0xff]
    %v1772 = vld [vmem:[%s7 + $0x18] sm:$0xff]
    %v1773 = vld [vmem:[%s7 + $0x20] sm:$0xff]
    %v1774 = vld [vmem:[%s7 + $0x28] sm:$0xff]
    %v1775 = vld [vmem:[%s7 + $0x30] sm:$0xff]
    %v1776 = vld [vmem:[%s7 + $0x38] sm:$0xff]
    %v1777 = vlaneseq
    %v1778 = vshrl.u32 %v1777, 7
    %v1779 = vsub.s32 0, %v1778
    %v1780 = vrot.slane %v71, %v1779
    %vm1781 = vcmask 523264
    %v1783 = vsel %vm1781, %v1767, 0
    %v1786 = vsel %vm1781, %v1768, 0
    %1788 = vmatprep.subr.mxu0 0.0
    %1789 = vmatpush1.msra.mxu0 %v1769
    %1790 = vmatprep.subr.mxu0 0.0
    %1791 = vmatpush1.msra.mxu0 %v1770
    %1792 = vmatprep.subr.mxu0 0.0
    %1793 = vmatpush1.msra.mxu0 %v1771
    %1794 = vmatprep.subr.mxu0 0.0
    %1795 = vmatpush1.msra.mxu0 %v1772
    %1796 = vmatprep.subr.mxu0 0.0
    %1797 = vmatpush1.msra.mxu0 %v1773
    %1798 = vmatprep.subr.mxu0 0.0
    %1799 = vmatpush1.msra.mxu0 %v1774
    %1800 = vmatprep.subr.mxu0 0.0
    %1801 = vmatpush1.msra.mxu0 %v1775
    %1802 = vmatprep.subr.mxu0 0.0
    %1803 = vmatpush1.msra.mxu0 %v1776
    %1804 = vmatprep.subr.mxu0 0.0
    %1805 = vmatpush1.msra.mxu0 0.0
    %1806 = vmatprep.subr.mxu0 0.0
    %1807 = vmatpush1.msra.mxu0 0.0
    %1808 = vmatprep.subr.mxu0 0.0
    %1809 = vmatpush1.msra.mxu0 0.0
    %1810 = vmatprep.subr.mxu0 0.0
    %1811 = vmatpush1.msra.mxu0 0.0
    %1812 = vmatprep.subr.mxu0 0.0
    %1813 = vmatpush1.msra.mxu0 0.0
    %1814 = vmatprep.subr.mxu0 0.0
    %1815 = vmatpush1.msra.mxu0 0.0
    %1816 = vmatprep.subr.mxu0 0.0
    %1817 = vmatpush1.msra.mxu0 0.0
    %1818 = vmatprep.subr.mxu0 0.0
    %1819 = vmatpush1.msra.mxu0 0.0
    %1820 = vmatprep.subr.mxu0 0.0
    %1821 = vmatpush1.msra.mxu0 0.0
    %1822 = vmatprep.subr.mxu0 0.0
    %1823 = vmatpush1.msra.mxu0 0.0
    %1824 = vmatprep.subr.mxu0 0.0
    %1825 = vmatpush1.msra.mxu0 0.0
    %1826 = vmatprep.subr.mxu0 0.0
    %1827 = vmatpush1.msra.mxu0 0.0
    %1828 = vmatprep.subr.mxu0 0.0
    %1829 = vmatpush1.msra.mxu0 0.0
    %1830 = vmatprep.subr.mxu0 0.0
    %1831 = vmatpush1.msra.mxu0 0.0
    %1832 = vmatprep.subr.mxu0 0.0
    %1833 = vmatpush1.msra.mxu0 0.0
    %1834 = vmatprep.subr.mxu0 0.0
    %1835 = vmatpush1.msra.mxu0 0.0
    %1836 = vmatprep.subr.mxu0 0.0
    %1837 = vmatpush1.msra.mxu0 0.0
    %1838 = vmatprep.subr.mxu0 0.0
    %1839 = vmatpush1.msra.mxu0 0.0
    %1840 = vmatprep.subr.mxu0 0.0
    %1841 = vmatpush1.msra.mxu0 0.0
    %1842 = vmatprep.subr.mxu0 0.0
    %1843 = vmatpush1.msra.mxu0 0.0
    %1844 = vmatprep.subr.mxu0 0.0
    %1845 = vmatpush1.msra.mxu0 0.0
    %1846 = vmatprep.subr.mxu0 0.0
    %1847 = vmatpush1.msra.mxu0 0.0
    %1848 = vmatprep.subr.mxu0 0.0
    %1849 = vmatpush1.msra.mxu0 0.0
    %1850 = vmatprep.subr.mxu0 0.0
    %1851 = vmatpush1.msra.mxu0 0.0
    %1852 = vmatprep.mubr.f32.mxu0 0.0
    %1853 = vmatmul.mubr.f32.gmra.mrb[0].mxu0 %v1783
    %v1854 = vpop.f32.mrb[0].mxu0
    %v1855 = vadd.f32 %v1780, %v1854
    %v1856 = vpop.f32.mrb[0].mxu0
    %1857 = vmatprep.mubr.f32.mxu0 0.0
    %1858 = vmatmul.mubr.f32.gmra.mrb[0].mxu0 %v1786
    %v1859 = vpop.f32.mrb[0].mxu0
    %v1860 = vadd.f32 %v1780, %v1859
    %v1861 = vpop.f32.mrb[0].mxu0
    %1862 = vdwg.mxu0
    %v1863 = vadd.f32 %v1673, %v1855
    %v1864 = vadd.f32 %v1674, %v1860
    %v1865 = vsel %vm83, %v1863, 0.0
    %1866 = vadd.xlane.f32.xlu0 %v1865
    %v1867 = vpop.xlane.xlu0 %1866
    %v1868 = vsel %vm83, %v1864, 0.0
    %1869 = vadd.xlane.f32.xlu0 %v1868
    %v1870 = vpop.xlane.xlu0 %1869
    %v1871 = vmul.f32 %v1867, %v1642
    %v1872 = vmul.f32 %v1870, %v1642
    %v1873 = vsub.f32 %v1863, %v1871
    %v1874 = vsub.f32 %v1864, %v1872
    %v1875 = vmul.f32 %v1873, %v1873
    %v1876 = vmul.f32 %v1874, %v1874
    %v1877 = vsel %vm83, %v1875, 0.0
    %1878 = vadd.xlane.f32.xlu0 %v1877
    %v1879 = vpop.xlane.xlu0 %1878
    %v1880 = vsel %vm83, %v1876, 0.0
    %1881 = vadd.xlane.f32.xlu0 %v1880
    %v1882 = vpop.xlane.xlu0 %1881
    %v1883 = vmul.f32 %v1879, %v1642
    %v1884 = vmul.f32 %v1882, %v1642
    %v1885 = vadd.f32 %v1883, 1e-05
    %v1886 = vadd.f32 %v1884, 1e-05
    %v1887 = vrsqrt.pop %v1885
    %v1888 = vrsqrt.pop %v1886
    %v1889 = vmul.f32 %v1873, %v1887
    %v1890 = vmul.f32 %v1874, %v1888
    %v1891 = vlaneseq
    %v1892 = vshrl.u32 %v1891, 7
    %v1893 = vsub.s32 0, %v1892
    %v1894 = vrot.slane %v69, %v1893
    %v1895 = vmul.f32 %v1889, %v1894
    %v1896 = vmul.f32 %v1890, %v1894
    %v1897 = vlaneseq
    %v1898 = vshrl.u32 %v1897, 7
    %v1899 = vsub.s32 0, %v1898
    %v1900 = vrot.slane %v70, %v1899
    %v1901 = vadd.f32 %v1895, %v1900
    %v1902 = vadd.f32 %v1896, %v1900
    %1903 = vst.msk [vmem:[#allocation7] sm:$0xff] %vm83, %v1901
    %1904 = vst.msk [vmem:[#allocation7 + $0x8] sm:$0xff] %vm83, %v1902
    // Predicated region
    $region46: #{tpu_custom_call.1} parent=1 // pred_check
      _
    $region47: #{tpu_custom_call.1} parent=1 // pred_check_branch
      %1906 = sbr.rel (0) target = $region49
    $region48: #{tpu_custom_call.1} parent=1 // pred_region
      %s1908 = ssub.s32 256, 256
      %1909 = vsyncadd [#allocation4], %s1908
      %s1910 = sshll.u32 [#allocation7], 4
      %s1911 = int_to_ptr.vmem [resolvable:$true] %s1910
      %1916 = dma.vmem_to_hbm [thread:$0]  %s1911, 256, %s9, [#allocation4], 128, 128, 8
    $region49: #{tpu_custom_call.1} parent=1 // pred_fallthru
      _
    // Predicated region
    $region50: #{tpu_custom_call.1} parent=1 // pred_check
      _
    $region51: #{tpu_custom_call.1} parent=1 // pred_check_branch
      %1918 = sbr.rel (0) target = $region53
    $region52: #{tpu_custom_call.1} parent=1 // pred_region
      %s1920 = ssub.s32 1024, 1024
      %1921 = vsyncadd [#allocation9], %s1920
      %s1922 = sshll.u32 [#allocation8], 4
      %s1923 = int_to_ptr.vmem [resolvable:$true] %s1922
      %1928 = dma.vmem_to_hbm [thread:$0]  %s1923, 1024, %s10, [#allocation9], 128, 128, 8
    $region53: #{tpu_custom_call.1} parent=1 // pred_fallthru
      _
    // Predicated region
    $region54: #{tpu_custom_call.1} parent=1 // pred_check
      _
    $region55: #{tpu_custom_call.1} parent=1 // pred_check_branch
      %1930 = sbr.rel (0) target = $region57
    $region56: #{tpu_custom_call.1} parent=1 // pred_region
      %1931 = dma.done [#allocation4], 256
    $region57: #{tpu_custom_call.1} parent=1 // pred_fallthru
      _
    // Predicated region
    $region58: #{tpu_custom_call.1} parent=1 // pred_check
      _
    $region59: #{tpu_custom_call.1} parent=1 // pred_check_branch
      %1933 = sbr.rel (0) target = $region61
    $region60: #{tpu_custom_call.1} parent=1 // pred_region
      %1934 = dma.done [#allocation9], 1024
    $region61: #{tpu_custom_call.1} parent=1 // pred_fallthru
      _
    %1935 = vsyncpa [#allocation3], 1
    %1936 = vsyncpa [#allocation6], 1
    %1937 = vsyncpa [#allocation4], 1
    %1938 = vsyncpa [#allocation9], 1

</llo_original>
